<compile_context>
chip_gen: v5e
topology: v5e:2x2
jax: 0.10.0
libtpu: 0.0.40
codegen_flags: <defaults>
</compile_context>

<pallas_src>
import functools

import jax
import jax.numpy as jnp
from jax import lax
from jax.experimental import pallas as pl
from jax.experimental.pallas import tpu as pltpu


# ----------------------------------------------------------------------------
# Kernel
# ----------------------------------------------------------------------------
def _hetgcn_epilogue(x_a, compat, w, activate):
    """Folded value head + 2-way softmax mix for one HetGCN direction.

    w: (3, D) rows = [wkv + wqv, wkv, wqv] so that
        cs = x_a    @ (wkv + wqv)
        cn = compat @ wkv + x_a @ wqv
    Computed as VPU multiplies + lane reductions (no tiny MXU ops).
    """
    cs = jnp.sum(x_a * w[0:1, :], axis=-1, keepdims=True)                    # (N, 1)
    cn = jnp.sum(compat * w[1:2, :] + x_a * w[2:3, :], axis=-1, keepdims=True)

    # ELU (alpha = 1)
    cs = jnp.where(cs > 0.0, cs, jnp.exp(cs) - 1.0)
    cn = jnp.where(cn > 0.0, cn, jnp.exp(cn) - 1.0)

    # softmax over the two logits (self / neighbor); denominator in (1, 2],
    # exact divide keeps the 1e-5 reference check tight.
    m = jnp.maximum(cs, cn)
    es = jnp.exp(cs - m)
    en = jnp.exp(cn - m)
    inv = 1.0 / (es + en)

    out = (es * inv) * x_a + (en * inv) * compat                             # (N, D)
    if activate:            # F.relu in EncoderLayer
        out = jnp.maximum(out, 0.0)
    return out


def _encoder_kernel(x_s_ref, x_i_ref, adj_ref, w_ref, out_ref, *,
                    activate, n_layers, lane_dense):
    w_all = w_ref[...]                                  # (L, 2, 3, D) — one DMA
    bb = x_s_ref.shape[0]                               # batch elems per grid step
    ns, d = x_s_ref.shape[1], x_s_ref.shape[2]
    ni = x_i_ref.shape[1]

    for b in range(bb):                                 # static unroll (bb <= B)
        x_s = x_s_ref[b]                                # (Ns, D)
        x_i = x_i_ref[b]                                # (Ni, D)
        adj = adj_ref[b]                                # (Ns, Ni)

        # Normalisers depend only on adj -> hoisted out of the layer loop.
        row_sums = jnp.sum(adj, axis=-1, keepdims=True)                      # (Ns, 1)
        inv_r = 1.0 / jnp.where(row_sums == 0.0, 1.0, row_sums)
        ones_col = jnp.ones((ns, 1), jnp.float32)
        col_sums = lax.dot_general(                     # adj^T @ 1, no transpose op
            adj, ones_col, (((0,), (0,)), ((), ())),
            preferred_element_type=jnp.float32)                              # (Ni, 1)
        inv_c = 1.0 / jnp.where(col_sums == 0.0, 1.0, col_sums)

        for l in range(n_layers):                       # fused layer stack; state
            w_s = w_all[l, 0]                           # stays resident in vregs
            w_i = w_all[l, 1]

            # shelf direction: aggregate items onto shelves
            compat_s = jnp.dot(adj, x_i, preferred_element_type=jnp.float32) * inv_r
            new_x_s = _hetgcn_epilogue(x_s, compat_s, w_s, activate)

            # item direction: transposed-operand dot_general, no adj.T relayout
            compat_i = lax.dot_general(
                adj, x_s, (((0,), (0,)), ((), ())),
                preferred_element_type=jnp.float32) * inv_c                  # (Ni, D)
            new_x_i = _hetgcn_epilogue(x_i, compat_i, w_i, activate)

            x_s, x_i = new_x_s, new_x_i

        merged = jnp.concatenate([x_s, x_i], axis=0).astype(out_ref.dtype)   # (Ns+Ni, D)
        if lane_dense:
            out_ref[b] = merged.reshape(((ns + ni) * d) // 128, 128)
        else:
            out_ref[b] = merged


# ----------------------------------------------------------------------------
# Parameter folding (done once, at parameter-load time)
# ----------------------------------------------------------------------------
def fold_hetgcn_weights(wq, wk, wv):
    """Fold torch Linear weights W_q (D,D), W_k (D,D), W_v (1,2D) into (3, D)."""
    D = wq.shape[0]
    wkv = wk.T @ wv[0, :D]          # (D,)  K path through W_v
    wqv = wq.T @ wv[0, D:]          # (D,)  Q path through W_v
    return jnp.stack([wkv + wqv, wkv, wqv], axis=0)                          # (3, D)


def fold_encoder_params(layer_params):
    """layer_params: a param dict (single EncoderLayer) or a sequence of dicts
    (stack of L EncoderLayers).  Returns one (L, 2, 3, D) array — a single
    kernel input for the whole stack."""
    if isinstance(layer_params, dict):
        layer_params = [layer_params]
    per_layer = []
    for p in layer_params:
        per_layer.append(jnp.stack([
            fold_hetgcn_weights(p["shelf_wq"], p["shelf_wk"], p["shelf_wv"]),
            fold_hetgcn_weights(p["item_wq"], p["item_wk"], p["item_wv"]),
        ], axis=0))                                                          # (2, 3, D)
    return jnp.stack(per_layer, axis=0).astype(jnp.float32)                  # (L, 2, 3, D)


# ----------------------------------------------------------------------------
# Core-count detection (grid collapse on 1-TC chips)
# ----------------------------------------------------------------------------
def _num_tensorcores():
    """Best effort: how many TensorCores a 'parallel' grid axis can use."""
    try:
        info = pltpu.get_tpu_info()
        for attr in ("num_cores", "core_count", "num_tensorcores",
                     "tensor_cores", "cores_per_chip"):
            n = getattr(info, attr, None)
            if isinstance(n, int) and n >= 1:
                return n
    except Exception:
        pass
    try:
        kind = jax.devices()[0].device_kind.lower()
        # megacore (v4 / v5p) and v7x expose 2 TensorCores per device
        if ("v4" in kind) or ("v5p" in kind) or ("v7" in kind) or ("7x" in kind):
            return 2
    except Exception:
        pass
    return 1                         # v5e / v6e / unknown -> collapse the grid


# ----------------------------------------------------------------------------
# Wrapper: whole encoder (L>=1 fused layers) in ONE pallas_call
# ----------------------------------------------------------------------------
def encoder_stack(shelf_embedding, item_embedding, cost_mat, folded_w,
                  activate=True, num_cores=None):
    B, Ns, D = shelf_embedding.shape
    Ni = item_embedding.shape[1]
    L = folded_w.shape[0]

    if num_cores is None:
        num_cores = _num_tensorcores()
    grid_b = num_cores if (num_cores > 1 and B % num_cores == 0) else 1
    bb = B // grid_b                                    # batch elems per grid step

    lane_ok = ((Ns + Ni) * D) % 128 == 0
    dense_rows = ((Ns + Ni) * D) // 128 if lane_ok else 0

    cost = pl.CostEstimate(
        flops=int(4 * B * L * Ns * Ni * D),
        transcendentals=int(4 * B * L * (Ns + Ni)),
        bytes_accessed=int(4 * (B * Ns * D + B * Ni * D + B * Ns * Ni
                                + folded_w.size + B * (Ns + Ni) * D)))

    def run(lane_dense):
        out_shape = jax.ShapeDtypeStruct(
            (B, dense_rows, 128) if lane_dense else (B, Ns + Ni, D),
            shelf_embedding.dtype)
        out_block = (bb, dense_rows, 128) if lane_dense else (bb, Ns + Ni, D)
        kernel = functools.partial(_encoder_kernel, activate=activate,
                                   n_layers=L, lane_dense=lane_dense)
        return pl.pallas_call(
            kernel,
            out_shape=out_shape,
            grid=(grid_b,),
            in_specs=[
                pl.BlockSpec((bb, Ns, D), lambda g: (g, 0, 0)),      # shelf emb
                pl.BlockSpec((bb, Ni, D), lambda g: (g, 0, 0)),      # item emb
                pl.BlockSpec((bb, Ns, Ni), lambda g: (g, 0, 0)),     # cost matrix
                pl.BlockSpec((L, 2, 3, D), lambda g: (0, 0, 0, 0)),  # all folded w
            ],
            out_specs=pl.BlockSpec(out_block, lambda g: (g, 0, 0)),  # merged slab
            compiler_params=pltpu.CompilerParams(
                dimension_semantics=("parallel",)),
            cost_estimate=cost,
        )(shelf_embedding, item_embedding, cost_mat, folded_w)

    if lane_ok:
        try:
            merged = run(lane_dense=True)
            # Row-major (B, rows, 128) -> (B, Ns+Ni, D) is layout-preserving (free).
            merged = merged.reshape(B, Ns + Ni, D)
        except Exception:
            # Fallback if the in-kernel (Ns+Ni, D) -> (rows, 128) relayout
            # does not lower on this toolchain.
            merged = run(lane_dense=False)
    else:
        merged = run(lane_dense=False)

    return merged[:, :Ns, :], merged[:, Ns:, :]


def encoder_layer(shelf_embedding, item_embedding, cost_mat, folded_params,
                  activate=True):
    """Forward of the PyTorch EncoderLayer (single layer == 1-layer stack)."""
    return encoder_stack(shelf_embedding, item_embedding, cost_mat,
                         folded_params, activate=activate)


# ----------------------------------------------------------------------------
# Pure-JAX reference (mirrors the PyTorch math exactly) for correctness check.
# ----------------------------------------------------------------------------
def _ref_hetgcn(x_a, x_b, adj, wq, wk, wv, activate):
    row_sums = jnp.sum(adj, axis=2)
    row_sums = jnp.where(row_sums == 0.0, 1.0, row_sums)
    adj_norm = adj / row_sums[..., None]
    compat = adj_norm @ x_b
    Q = x_a @ wq.T
    K_self = x_a @ wk.T
    K_neigh = compat @ wk.T
    cs = jax.nn.elu(jnp.concatenate([K_self, Q], -1) @ wv.T)
    cn = jax.nn.elu(jnp.concatenate([K_neigh, Q], -1) @ wv.T)
    w = jax.nn.softmax(jnp.concatenate([cs, cn], -1), -1)
    out = w[..., 0:1] * x_a + w[..., 1:2] * compat
    return jax.nn.relu(out) if activate else out


def _ref_encoder(shelf, item, cost, params, activate=True):
    s = _ref_hetgcn(shelf, item, cost,
                    params["shelf_wq"], params["shelf_wk"], params["shelf_wv"],
                    activate)
    i = _ref_hetgcn(item, shelf, jnp.transpose(cost, (0, 2, 1)),
                    params["item_wq"], params["item_wk"], params["item_wv"],
                    activate)
    return s, i


if __name__ == "__main__":
    B, N_SHELF, N_ITEM, D = 2, 16, 8, 32

    key = jax.random.PRNGKey(0)
    k_params, k_data = jax.random.split(key)

    # torch Linear default init: U(-1/sqrt(fan_in), +1/sqrt(fan_in)), bias=False
    def lin_init(k, out_f, in_f):
        bound = 1.0 / jnp.sqrt(jnp.float32(in_f))
        return jax.random.uniform(k, (out_f, in_f), jnp.float32, -bound, bound)

    def make_layer_params(k):
        ks = jax.random.split(k, 6)
        return {
            "shelf_wq": lin_init(ks[0], D, D),
            "shelf_wk": lin_init(ks[1], D, D),
            "shelf_wv": lin_init(ks[2], 1, 2 * D),
            "item_wq": lin_init(ks[3], D, D),
            "item_wk": lin_init(ks[4], D, D),
            "item_wv": lin_init(ks[5], 1, 2 * D),
        }

    kp = jax.random.split(k_params, 2)
    params_l0 = make_layer_params(kp[0])
    params_l1 = make_layer_params(kp[1])

    kd = jax.random.split(k_data, 3)
    shelf_embedding = jax.random.normal(kd[0], (B, N_SHELF, D), jnp.float32)
    item_embedding = jax.random.normal(kd[1], (B, N_ITEM, D), jnp.float32)
    cost_mat = jax.random.uniform(kd[2], (B, N_SHELF, N_ITEM), jnp.float32)
    cost_mat = cost_mat.at[:, 0, :].set(0.0)   # exercise the zero-row-sum guard

    # --- single EncoderLayer (the module spec) ------------------------------
    folded1 = fold_encoder_params(params_l0)            # (1, 2, 3, D)
    shelf_out, item_out = encoder_layer(shelf_embedding, item_embedding,
                                        cost_mat, folded1, activate=True)
    jax.block_until_ready((shelf_out, item_out))

    shelf_ref, item_ref = _ref_encoder(shelf_embedding, item_embedding,
                                       cost_mat, params_l0, activate=True)
    assert jnp.allclose(shelf_out, shelf_ref, atol=1e-5, rtol=1e-5)
    assert jnp.allclose(item_out, item_ref, atol=1e-5, rtol=1e-5)

    # --- fused 2-layer stack: embeddings stay resident inside the kernel ----
    folded2 = fold_encoder_params([params_l0, params_l1])   # (2, 2, 3, D)
    s2, i2 = encoder_stack(shelf_embedding, item_embedding, cost_mat,
                           folded2, activate=True)
    jax.block_until_ready((s2, i2))

    sr, ir = _ref_encoder(shelf_embedding, item_embedding, cost_mat,
                          params_l0, activate=True)
    sr, ir = _ref_encoder(sr, ir, cost_mat, params_l1, activate=True)
    assert jnp.allclose(s2, sr, atol=1e-5, rtol=1e-5)
    assert jnp.allclose(i2, ir, atol=1e-5, rtol=1e-5)

    print("KERNEL_OK")
</pallas_src>

<mosaic_0001>
module attributes {stable_mosaic.version = 11 : i64} {
  func.func @_encoder_kernel(%arg0: i32, %arg1: memref<2x16x32xf32, #tpu.memory_space<vmem>>, %arg2: memref<2x8x32xf32, #tpu.memory_space<vmem>>, %arg3: memref<2x16x8xf32, #tpu.memory_space<vmem>>, %arg4: memref<1x2x3x32xf32, #tpu.memory_space<vmem>>, %arg5: memref<2x6x128xf32, #tpu.memory_space<vmem>>) attributes {dimension_semantics = [#tpu.dimension_semantics<parallel>], iteration_bounds = array<i64: 1>, scalar_prefetch = 0 : i64, scratch_operands = 0 : i64, tpu.core_type = #tpu.core_type<tc>, window_params = [{transform_indices = @transform_0, window_bounds = array<i64: 2, 16, 32>}, {transform_indices = @transform_1, window_bounds = array<i64: 2, 8, 32>}, {transform_indices = @transform_2, window_bounds = array<i64: 2, 16, 8>}, {pipeline_mode = #tpu.pipeline_mode<synchronous>, transform_indices = @transform_3, window_bounds = array<i64: 1, 2, 3, 32>}, {transform_indices = @transform_4, window_bounds = array<i64: 2, 6, 128>}]} {
    %c0 = arith.constant 0 : index
    %c0_0 = arith.constant 0 : index
    %c0_1 = arith.constant 0 : index
    %c0_2 = arith.constant 0 : index
    %0 = vector.load %arg4[%c0, %c0_0, %c0_1, %c0_2] : memref<1x2x3x32xf32, #tpu.memory_space<vmem>>, vector<1x2x3x32xf32>
    %c0_3 = arith.constant 0 : index
    %c0_4 = arith.constant 0 : index
    %c0_5 = arith.constant 0 : index
    %1 = vector.load %arg1[%c0_3, %c0_4, %c0_5] : memref<2x16x32xf32, #tpu.memory_space<vmem>>, vector<1x16x32xf32>
    %2 = vector.shape_cast %1 : vector<1x16x32xf32> to vector<16x32xf32>
    %c0_6 = arith.constant 0 : index
    %c0_7 = arith.constant 0 : index
    %c0_8 = arith.constant 0 : index
    %3 = vector.load %arg2[%c0_6, %c0_7, %c0_8] : memref<2x8x32xf32, #tpu.memory_space<vmem>>, vector<1x8x32xf32>
    %4 = vector.shape_cast %3 : vector<1x8x32xf32> to vector<8x32xf32>
    %c0_9 = arith.constant 0 : index
    %c0_10 = arith.constant 0 : index
    %c0_11 = arith.constant 0 : index
    %5 = vector.load %arg3[%c0_9, %c0_10, %c0_11] : memref<2x16x8xf32, #tpu.memory_space<vmem>>, vector<1x16x8xf32>
    %6 = vector.shape_cast %5 : vector<1x16x8xf32> to vector<16x8xf32>
    %cst = arith.constant dense<0.000000e+00> : vector<16xf32>
    %7 = vector.multi_reduction <add>, %6, %cst [1] : vector<16x8xf32> to vector<16xf32>
    %8 = vector.shape_cast %7 : vector<16xf32> to vector<16x1xf32>
    %cst_12 = arith.constant 0.000000e+00 : f32
    %9 = vector.broadcast %cst_12 : f32 to vector<16x1xf32>
    %10 = arith.cmpf oeq, %8, %9 : vector<16x1xf32>
    %cst_13 = arith.constant 1.000000e+00 : f32
    %11 = vector.broadcast %cst_13 : f32 to vector<16x1xf32>
    %12 = arith.select %10, %11, %8 : vector<16x1xi1>, vector<16x1xf32>
    %cst_14 = arith.constant 1.000000e+00 : f32
    %13 = vector.broadcast %cst_14 : f32 to vector<16x1xf32>
    %14 = arith.divf %13, %12 : vector<16x1xf32>
    %cst_15 = arith.constant 1.000000e+00 : f32
    %15 = vector.broadcast %cst_15 : f32 to vector<16x1xf32>
    %cst_16 = arith.constant dense<0.000000e+00> : vector<8x1xf32>
    %16 = tpu.matmul %6, %15, %cst_16 {dimension_numbers = #tpu.dot_dimension_numbers<[0], [0], [1], [1], [0, 1, 1, 1], [], []>} : vector<16x8xf32>, vector<16x1xf32>, vector<8x1xf32> -> vector<8x1xf32>
    %cst_17 = arith.constant 0.000000e+00 : f32
    %17 = vector.broadcast %cst_17 : f32 to vector<8x1xf32>
    %18 = arith.cmpf oeq, %16, %17 : vector<8x1xf32>
    %cst_18 = arith.constant 1.000000e+00 : f32
    %19 = vector.broadcast %cst_18 : f32 to vector<8x1xf32>
    %20 = arith.select %18, %19, %16 : vector<8x1xi1>, vector<8x1xf32>
    %cst_19 = arith.constant 1.000000e+00 : f32
    %21 = vector.broadcast %cst_19 : f32 to vector<8x1xf32>
    %22 = arith.divf %21, %20 : vector<8x1xf32>
    %23 = vector.extract_strided_slice %0 {offsets = [0, 0, 0, 0], sizes = [1, 1, 3, 32], strides = [1, 1, 1, 1]} : vector<1x2x3x32xf32> to vector<1x1x3x32xf32>
    %24 = vector.shape_cast %23 : vector<1x1x3x32xf32> to vector<3x32xf32>
    %25 = vector.extract_strided_slice %0 {offsets = [0, 1, 0, 0], sizes = [1, 1, 3, 32], strides = [1, 1, 1, 1]} : vector<1x2x3x32xf32> to vector<1x1x3x32xf32>
    %26 = vector.shape_cast %25 : vector<1x1x3x32xf32> to vector<3x32xf32>
    %cst_20 = arith.constant dense<0.000000e+00> : vector<16x32xf32>
    %27 = tpu.matmul %6, %4, %cst_20 {dimension_numbers = #tpu.dot_dimension_numbers<[1], [0], [0], [1], [0, 0, 1, 1], [], []>} : vector<16x8xf32>, vector<8x32xf32>, vector<16x32xf32> -> vector<16x32xf32>
    %28 = vector.broadcast %14 : vector<16x1xf32> to vector<16x32xf32>
    %29 = arith.mulf %27, %28 : vector<16x32xf32>
    %30 = vector.extract_strided_slice %24 {offsets = [0, 0], sizes = [1, 32], strides = [1, 1]} : vector<3x32xf32> to vector<1x32xf32>
    %31 = vector.broadcast %30 : vector<1x32xf32> to vector<16x32xf32>
    %32 = arith.mulf %2, %31 : vector<16x32xf32>
    %cst_21 = arith.constant dense<0.000000e+00> : vector<16xf32>
    %33 = vector.multi_reduction <add>, %32, %cst_21 [1] : vector<16x32xf32> to vector<16xf32>
    %34 = vector.shape_cast %33 : vector<16xf32> to vector<16x1xf32>
    %35 = vector.extract_strided_slice %24 {offsets = [1, 0], sizes = [1, 32], strides = [1, 1]} : vector<3x32xf32> to vector<1x32xf32>
    %36 = vector.broadcast %35 : vector<1x32xf32> to vector<16x32xf32>
    %37 = arith.mulf %29, %36 : vector<16x32xf32>
    %38 = vector.extract_strided_slice %24 {offsets = [2, 0], sizes = [1, 32], strides = [1, 1]} : vector<3x32xf32> to vector<1x32xf32>
    %39 = vector.broadcast %38 : vector<1x32xf32> to vector<16x32xf32>
    %40 = arith.mulf %2, %39 : vector<16x32xf32>
    %41 = arith.addf %37, %40 : vector<16x32xf32>
    %cst_22 = arith.constant dense<0.000000e+00> : vector<16xf32>
    %42 = vector.multi_reduction <add>, %41, %cst_22 [1] : vector<16x32xf32> to vector<16xf32>
    %43 = vector.shape_cast %42 : vector<16xf32> to vector<16x1xf32>
    %cst_23 = arith.constant 0.000000e+00 : f32
    %44 = vector.broadcast %cst_23 : f32 to vector<16x1xf32>
    %45 = arith.cmpf ogt, %34, %44 : vector<16x1xf32>
    %46 = math.exp %34 : vector<16x1xf32>
    %cst_24 = arith.constant 1.000000e+00 : f32
    %47 = vector.broadcast %cst_24 : f32 to vector<16x1xf32>
    %48 = arith.subf %46, %47 : vector<16x1xf32>
    %49 = arith.select %45, %34, %48 : vector<16x1xi1>, vector<16x1xf32>
    %cst_25 = arith.constant 0.000000e+00 : f32
    %50 = vector.broadcast %cst_25 : f32 to vector<16x1xf32>
    %51 = arith.cmpf ogt, %43, %50 : vector<16x1xf32>
    %52 = math.exp %43 : vector<16x1xf32>
    %cst_26 = arith.constant 1.000000e+00 : f32
    %53 = vector.broadcast %cst_26 : f32 to vector<16x1xf32>
    %54 = arith.subf %52, %53 : vector<16x1xf32>
    %55 = arith.select %51, %43, %54 : vector<16x1xi1>, vector<16x1xf32>
    %56 = arith.maximumf %49, %55 : vector<16x1xf32>
    %57 = arith.subf %49, %56 : vector<16x1xf32>
    %58 = math.exp %57 : vector<16x1xf32>
    %59 = arith.subf %55, %56 : vector<16x1xf32>
    %60 = math.exp %59 : vector<16x1xf32>
    %61 = arith.addf %58, %60 : vector<16x1xf32>
    %cst_27 = arith.constant 1.000000e+00 : f32
    %62 = vector.broadcast %cst_27 : f32 to vector<16x1xf32>
    %63 = arith.divf %62, %61 : vector<16x1xf32>
    %64 = arith.mulf %58, %63 : vector<16x1xf32>
    %65 = vector.broadcast %64 : vector<16x1xf32> to vector<16x32xf32>
    %66 = arith.mulf %65, %2 : vector<16x32xf32>
    %67 = arith.mulf %60, %63 : vector<16x1xf32>
    %68 = vector.broadcast %67 : vector<16x1xf32> to vector<16x32xf32>
    %69 = arith.mulf %68, %29 : vector<16x32xf32>
    %70 = arith.addf %66, %69 : vector<16x32xf32>
    %cst_28 = arith.constant 0.000000e+00 : f32
    %71 = vector.broadcast %cst_28 : f32 to vector<16x32xf32>
    %72 = arith.maximumf %70, %71 : vector<16x32xf32>
    %cst_29 = arith.constant dense<0.000000e+00> : vector<8x32xf32>
    %73 = tpu.matmul %6, %2, %cst_29 {dimension_numbers = #tpu.dot_dimension_numbers<[0], [0], [1], [1], [0, 1, 1, 1], [], []>} : vector<16x8xf32>, vector<16x32xf32>, vector<8x32xf32> -> vector<8x32xf32>
    %74 = vector.broadcast %22 : vector<8x1xf32> to vector<8x32xf32>
    %75 = arith.mulf %73, %74 : vector<8x32xf32>
    %76 = vector.extract_strided_slice %26 {offsets = [0, 0], sizes = [1, 32], strides = [1, 1]} : vector<3x32xf32> to vector<1x32xf32>
    %77 = vector.broadcast %76 : vector<1x32xf32> to vector<8x32xf32>
    %78 = arith.mulf %4, %77 : vector<8x32xf32>
    %cst_30 = arith.constant dense<0.000000e+00> : vector<8xf32>
    %79 = vector.multi_reduction <add>, %78, %cst_30 [1] : vector<8x32xf32> to vector<8xf32>
    %80 = vector.shape_cast %79 : vector<8xf32> to vector<8x1xf32>
    %81 = vector.extract_strided_slice %26 {offsets = [1, 0], sizes = [1, 32], strides = [1, 1]} : vector<3x32xf32> to vector<1x32xf32>
    %82 = vector.broadcast %81 : vector<1x32xf32> to vector<8x32xf32>
    %83 = arith.mulf %75, %82 : vector<8x32xf32>
    %84 = vector.extract_strided_slice %26 {offsets = [2, 0], sizes = [1, 32], strides = [1, 1]} : vector<3x32xf32> to vector<1x32xf32>
    %85 = vector.broadcast %84 : vector<1x32xf32> to vector<8x32xf32>
    %86 = arith.mulf %4, %85 : vector<8x32xf32>
    %87 = arith.addf %83, %86 : vector<8x32xf32>
    %cst_31 = arith.constant dense<0.000000e+00> : vector<8xf32>
    %88 = vector.multi_reduction <add>, %87, %cst_31 [1] : vector<8x32xf32> to vector<8xf32>
    %89 = vector.shape_cast %88 : vector<8xf32> to vector<8x1xf32>
    %cst_32 = arith.constant 0.000000e+00 : f32
    %90 = vector.broadcast %cst_32 : f32 to vector<8x1xf32>
    %91 = arith.cmpf ogt, %80, %90 : vector<8x1xf32>
    %92 = math.exp %80 : vector<8x1xf32>
    %cst_33 = arith.constant 1.000000e+00 : f32
    %93 = vector.broadcast %cst_33 : f32 to vector<8x1xf32>
    %94 = arith.subf %92, %93 : vector<8x1xf32>
    %95 = arith.select %91, %80, %94 : vector<8x1xi1>, vector<8x1xf32>
    %cst_34 = arith.constant 0.000000e+00 : f32
    %96 = vector.broadcast %cst_34 : f32 to vector<8x1xf32>
    %97 = arith.cmpf ogt, %89, %96 : vector<8x1xf32>
    %98 = math.exp %89 : vector<8x1xf32>
    %cst_35 = arith.constant 1.000000e+00 : f32
    %99 = vector.broadcast %cst_35 : f32 to vector<8x1xf32>
    %100 = arith.subf %98, %99 : vector<8x1xf32>
    %101 = arith.select %97, %89, %100 : vector<8x1xi1>, vector<8x1xf32>
    %102 = arith.maximumf %95, %101 : vector<8x1xf32>
    %103 = arith.subf %95, %102 : vector<8x1xf32>
    %104 = math.exp %103 : vector<8x1xf32>
    %105 = arith.subf %101, %102 : vector<8x1xf32>
    %106 = math.exp %105 : vector<8x1xf32>
    %107 = arith.addf %104, %106 : vector<8x1xf32>
    %cst_36 = arith.constant 1.000000e+00 : f32
    %108 = vector.broadcast %cst_36 : f32 to vector<8x1xf32>
    %109 = arith.divf %108, %107 : vector<8x1xf32>
    %110 = arith.mulf %104, %109 : vector<8x1xf32>
    %111 = vector.broadcast %110 : vector<8x1xf32> to vector<8x32xf32>
    %112 = arith.mulf %111, %4 : vector<8x32xf32>
    %113 = arith.mulf %106, %109 : vector<8x1xf32>
    %114 = vector.broadcast %113 : vector<8x1xf32> to vector<8x32xf32>
    %115 = arith.mulf %114, %75 : vector<8x32xf32>
    %116 = arith.addf %112, %115 : vector<8x32xf32>
    %cst_37 = arith.constant 0.000000e+00 : f32
    %117 = vector.broadcast %cst_37 : f32 to vector<8x32xf32>
    %118 = arith.maximumf %116, %117 : vector<8x32xf32>
    %119 = tpu.concatenate %72, %118 in 0 : vector<16x32xf32>, vector<8x32xf32> -> vector<24x32xf32>
    %120 = vector.shape_cast %119 : vector<24x32xf32> to vector<6x128xf32>
    %c0_38 = arith.constant 0 : index
    %c0_39 = arith.constant 0 : index
    %c0_40 = arith.constant 0 : index
    %121 = vector.load %arg5[%c0_38, %c0_39, %c0_40] : memref<2x6x128xf32, #tpu.memory_space<vmem>>, vector<1x6x128xf32>
    %122 = vector.shape_cast %121 : vector<1x6x128xf32> to vector<6x128xf32>
    %123 = vector.shape_cast %120 : vector<6x128xf32> to vector<1x6x128xf32>
    tpu.vector_store %arg5[%c0_38, %c0_39, %c0_40], %123 {strides = array<i32>} : memref<2x6x128xf32, #tpu.memory_space<vmem>>, vector<1x6x128xf32>,
    %c1 = arith.constant 1 : index
    %c0_41 = arith.constant 0 : index
    %c0_42 = arith.constant 0 : index
    %124 = vector.load %arg1[%c1, %c0_41, %c0_42] : memref<2x16x32xf32, #tpu.memory_space<vmem>>, vector<1x16x32xf32>
    %125 = vector.shape_cast %124 : vector<1x16x32xf32> to vector<16x32xf32>
    %c1_43 = arith.constant 1 : index
    %c0_44 = arith.constant 0 : index
    %c0_45 = arith.constant 0 : index
    %126 = vector.load %arg2[%c1_43, %c0_44, %c0_45] : memref<2x8x32xf32, #tpu.memory_space<vmem>>, vector<1x8x32xf32>
    %127 = vector.shape_cast %126 : vector<1x8x32xf32> to vector<8x32xf32>
    %c1_46 = arith.constant 1 : index
    %c0_47 = arith.constant 0 : index
    %c0_48 = arith.constant 0 : index
    %128 = vector.load %arg3[%c1_46, %c0_47, %c0_48] : memref<2x16x8xf32, #tpu.memory_space<vmem>>, vector<1x16x8xf32>
    %129 = vector.shape_cast %128 : vector<1x16x8xf32> to vector<16x8xf32>
    %cst_49 = arith.constant dense<0.000000e+00> : vector<16xf32>
    %130 = vector.multi_reduction <add>, %129, %cst_49 [1] : vector<16x8xf32> to vector<16xf32>
    %131 = vector.shape_cast %130 : vector<16xf32> to vector<16x1xf32>
    %cst_50 = arith.constant 0.000000e+00 : f32
    %132 = vector.broadcast %cst_50 : f32 to vector<16x1xf32>
    %133 = arith.cmpf oeq, %131, %132 : vector<16x1xf32>
    %cst_51 = arith.constant 1.000000e+00 : f32
    %134 = vector.broadcast %cst_51 : f32 to vector<16x1xf32>
    %135 = arith.select %133, %134, %131 : vector<16x1xi1>, vector<16x1xf32>
    %cst_52 = arith.constant 1.000000e+00 : f32
    %136 = vector.broadcast %cst_52 : f32 to vector<16x1xf32>
    %137 = arith.divf %136, %135 : vector<16x1xf32>
    %cst_53 = arith.constant 1.000000e+00 : f32
    %138 = vector.broadcast %cst_53 : f32 to vector<16x1xf32>
    %cst_54 = arith.constant dense<0.000000e+00> : vector<8x1xf32>
    %139 = tpu.matmul %129, %138, %cst_54 {dimension_numbers = #tpu.dot_dimension_numbers<[0], [0], [1], [1], [0, 1, 1, 1], [], []>} : vector<16x8xf32>, vector<16x1xf32>, vector<8x1xf32> -> vector<8x1xf32>
    %cst_55 = arith.constant 0.000000e+00 : f32
    %140 = vector.broadcast %cst_55 : f32 to vector<8x1xf32>
    %141 = arith.cmpf oeq, %139, %140 : vector<8x1xf32>
    %cst_56 = arith.constant 1.000000e+00 : f32
    %142 = vector.broadcast %cst_56 : f32 to vector<8x1xf32>
    %143 = arith.select %141, %142, %139 : vector<8x1xi1>, vector<8x1xf32>
    %cst_57 = arith.constant 1.000000e+00 : f32
    %144 = vector.broadcast %cst_57 : f32 to vector<8x1xf32>
    %145 = arith.divf %144, %143 : vector<8x1xf32>
    %146 = vector.extract_strided_slice %0 {offsets = [0, 0, 0, 0], sizes = [1, 1, 3, 32], strides = [1, 1, 1, 1]} : vector<1x2x3x32xf32> to vector<1x1x3x32xf32>
    %147 = vector.shape_cast %146 : vector<1x1x3x32xf32> to vector<3x32xf32>
    %148 = vector.extract_strided_slice %0 {offsets = [0, 1, 0, 0], sizes = [1, 1, 3, 32], strides = [1, 1, 1, 1]} : vector<1x2x3x32xf32> to vector<1x1x3x32xf32>
    %149 = vector.shape_cast %148 : vector<1x1x3x32xf32> to vector<3x32xf32>
    %cst_58 = arith.constant dense<0.000000e+00> : vector<16x32xf32>
    %150 = tpu.matmul %129, %127, %cst_58 {dimension_numbers = #tpu.dot_dimension_numbers<[1], [0], [0], [1], [0, 0, 1, 1], [], []>} : vector<16x8xf32>, vector<8x32xf32>, vector<16x32xf32> -> vector<16x32xf32>
    %151 = vector.broadcast %137 : vector<16x1xf32> to vector<16x32xf32>
    %152 = arith.mulf %150, %151 : vector<16x32xf32>
    %153 = vector.extract_strided_slice %147 {offsets = [0, 0], sizes = [1, 32], strides = [1, 1]} : vector<3x32xf32> to vector<1x32xf32>
    %154 = vector.broadcast %153 : vector<1x32xf32> to vector<16x32xf32>
    %155 = arith.mulf %125, %154 : vector<16x32xf32>
    %cst_59 = arith.constant dense<0.000000e+00> : vector<16xf32>
    %156 = vector.multi_reduction <add>, %155, %cst_59 [1] : vector<16x32xf32> to vector<16xf32>
    %157 = vector.shape_cast %156 : vector<16xf32> to vector<16x1xf32>
    %158 = vector.extract_strided_slice %147 {offsets = [1, 0], sizes = [1, 32], strides = [1, 1]} : vector<3x32xf32> to vector<1x32xf32>
    %159 = vector.broadcast %158 : vector<1x32xf32> to vector<16x32xf32>
    %160 = arith.mulf %152, %159 : vector<16x32xf32>
    %161 = vector.extract_strided_slice %147 {offsets = [2, 0], sizes = [1, 32], strides = [1, 1]} : vector<3x32xf32> to vector<1x32xf32>
    %162 = vector.broadcast %161 : vector<1x32xf32> to vector<16x32xf32>
    %163 = arith.mulf %125, %162 : vector<16x32xf32>
    %164 = arith.addf %160, %163 : vector<16x32xf32>
    %cst_60 = arith.constant dense<0.000000e+00> : vector<16xf32>
    %165 = vector.multi_reduction <add>, %164, %cst_60 [1] : vector<16x32xf32> to vector<16xf32>
    %166 = vector.shape_cast %165 : vector<16xf32> to vector<16x1xf32>
    %cst_61 = arith.constant 0.000000e+00 : f32
    %167 = vector.broadcast %cst_61 : f32 to vector<16x1xf32>
    %168 = arith.cmpf ogt, %157, %167 : vector<16x1xf32>
    %169 = math.exp %157 : vector<16x1xf32>
    %cst_62 = arith.constant 1.000000e+00 : f32
    %170 = vector.broadcast %cst_62 : f32 to vector<16x1xf32>
    %171 = arith.subf %169, %170 : vector<16x1xf32>
    %172 = arith.select %168, %157, %171 : vector<16x1xi1>, vector<16x1xf32>
    %cst_63 = arith.constant 0.000000e+00 : f32
    %173 = vector.broadcast %cst_63 : f32 to vector<16x1xf32>
    %174 = arith.cmpf ogt, %166, %173 : vector<16x1xf32>
    %175 = math.exp %166 : vector<16x1xf32>
    %cst_64 = arith.constant 1.000000e+00 : f32
    %176 = vector.broadcast %cst_64 : f32 to vector<16x1xf32>
    %177 = arith.subf %175, %176 : vector<16x1xf32>
    %178 = arith.select %174, %166, %177 : vector<16x1xi1>, vector<16x1xf32>
    %179 = arith.maximumf %172, %178 : vector<16x1xf32>
    %180 = arith.subf %172, %179 : vector<16x1xf32>
    %181 = math.exp %180 : vector<16x1xf32>
    %182 = arith.subf %178, %179 : vector<16x1xf32>
    %183 = math.exp %182 : vector<16x1xf32>
    %184 = arith.addf %181, %183 : vector<16x1xf32>
    %cst_65 = arith.constant 1.000000e+00 : f32
    %185 = vector.broadcast %cst_65 : f32 to vector<16x1xf32>
    %186 = arith.divf %185, %184 : vector<16x1xf32>
    %187 = arith.mulf %181, %186 : vector<16x1xf32>
    %188 = vector.broadcast %187 : vector<16x1xf32> to vector<16x32xf32>
    %189 = arith.mulf %188, %125 : vector<16x32xf32>
    %190 = arith.mulf %183, %186 : vector<16x1xf32>
    %191 = vector.broadcast %190 : vector<16x1xf32> to vector<16x32xf32>
    %192 = arith.mulf %191, %152 : vector<16x32xf32>
    %193 = arith.addf %189, %192 : vector<16x32xf32>
    %cst_66 = arith.constant 0.000000e+00 : f32
    %194 = vector.broadcast %cst_66 : f32 to vector<16x32xf32>
    %195 = arith.maximumf %193, %194 : vector<16x32xf32>
    %cst_67 = arith.constant dense<0.000000e+00> : vector<8x32xf32>
    %196 = tpu.matmul %129, %125, %cst_67 {dimension_numbers = #tpu.dot_dimension_numbers<[0], [0], [1], [1], [0, 1, 1, 1], [], []>} : vector<16x8xf32>, vector<16x32xf32>, vector<8x32xf32> -> vector<8x32xf32>
    %197 = vector.broadcast %145 : vector<8x1xf32> to vector<8x32xf32>
    %198 = arith.mulf %196, %197 : vector<8x32xf32>
    %199 = vector.extract_strided_slice %149 {offsets = [0, 0], sizes = [1, 32], strides = [1, 1]} : vector<3x32xf32> to vector<1x32xf32>
    %200 = vector.broadcast %199 : vector<1x32xf32> to vector<8x32xf32>
    %201 = arith.mulf %127, %200 : vector<8x32xf32>
    %cst_68 = arith.constant dense<0.000000e+00> : vector<8xf32>
    %202 = vector.multi_reduction <add>, %201, %cst_68 [1] : vector<8x32xf32> to vector<8xf32>
    %203 = vector.shape_cast %202 : vector<8xf32> to vector<8x1xf32>
    %204 = vector.extract_strided_slice %149 {offsets = [1, 0], sizes = [1, 32], strides = [1, 1]} : vector<3x32xf32> to vector<1x32xf32>
    %205 = vector.broadcast %204 : vector<1x32xf32> to vector<8x32xf32>
    %206 = arith.mulf %198, %205 : vector<8x32xf32>
    %207 = vector.extract_strided_slice %149 {offsets = [2, 0], sizes = [1, 32], strides = [1, 1]} : vector<3x32xf32> to vector<1x32xf32>
    %208 = vector.broadcast %207 : vector<1x32xf32> to vector<8x32xf32>
    %209 = arith.mulf %127, %208 : vector<8x32xf32>
    %210 = arith.addf %206, %209 : vector<8x32xf32>
    %cst_69 = arith.constant dense<0.000000e+00> : vector<8xf32>
    %211 = vector.multi_reduction <add>, %210, %cst_69 [1] : vector<8x32xf32> to vector<8xf32>
    %212 = vector.shape_cast %211 : vector<8xf32> to vector<8x1xf32>
    %cst_70 = arith.constant 0.000000e+00 : f32
    %213 = vector.broadcast %cst_70 : f32 to vector<8x1xf32>
    %214 = arith.cmpf ogt, %203, %213 : vector<8x1xf32>
    %215 = math.exp %203 : vector<8x1xf32>
    %cst_71 = arith.constant 1.000000e+00 : f32
    %216 = vector.broadcast %cst_71 : f32 to vector<8x1xf32>
    %217 = arith.subf %215, %216 : vector<8x1xf32>
    %218 = arith.select %214, %203, %217 : vector<8x1xi1>, vector<8x1xf32>
    %cst_72 = arith.constant 0.000000e+00 : f32
    %219 = vector.broadcast %cst_72 : f32 to vector<8x1xf32>
    %220 = arith.cmpf ogt, %212, %219 : vector<8x1xf32>
    %221 = math.exp %212 : vector<8x1xf32>
    %cst_73 = arith.constant 1.000000e+00 : f32
    %222 = vector.broadcast %cst_73 : f32 to vector<8x1xf32>
    %223 = arith.subf %221, %222 : vector<8x1xf32>
    %224 = arith.select %220, %212, %223 : vector<8x1xi1>, vector<8x1xf32>
    %225 = arith.maximumf %218, %224 : vector<8x1xf32>
    %226 = arith.subf %218, %225 : vector<8x1xf32>
    %227 = math.exp %226 : vector<8x1xf32>
    %228 = arith.subf %224, %225 : vector<8x1xf32>
    %229 = math.exp %228 : vector<8x1xf32>
    %230 = arith.addf %227, %229 : vector<8x1xf32>
    %cst_74 = arith.constant 1.000000e+00 : f32
    %231 = vector.broadcast %cst_74 : f32 to vector<8x1xf32>
    %232 = arith.divf %231, %230 : vector<8x1xf32>
    %233 = arith.mulf %227, %232 : vector<8x1xf32>
    %234 = vector.broadcast %233 : vector<8x1xf32> to vector<8x32xf32>
    %235 = arith.mulf %234, %127 : vector<8x32xf32>
    %236 = arith.mulf %229, %232 : vector<8x1xf32>
    %237 = vector.broadcast %236 : vector<8x1xf32> to vector<8x32xf32>
    %238 = arith.mulf %237, %198 : vector<8x32xf32>
    %239 = arith.addf %235, %238 : vector<8x32xf32>
    %cst_75 = arith.constant 0.000000e+00 : f32
    %240 = vector.broadcast %cst_75 : f32 to vector<8x32xf32>
    %241 = arith.maximumf %239, %240 : vector<8x32xf32>
    %242 = tpu.concatenate %195, %241 in 0 : vector<16x32xf32>, vector<8x32xf32> -> vector<24x32xf32>
    %243 = vector.shape_cast %242 : vector<24x32xf32> to vector<6x128xf32>
    %c1_76 = arith.constant 1 : index
    %c0_77 = arith.constant 0 : index
    %c0_78 = arith.constant 0 : index
    %244 = vector.load %arg5[%c1_76, %c0_77, %c0_78] : memref<2x6x128xf32, #tpu.memory_space<vmem>>, vector<1x6x128xf32>
    %245 = vector.shape_cast %244 : vector<1x6x128xf32> to vector<6x128xf32>
    %246 = vector.shape_cast %243 : vector<6x128xf32> to vector<1x6x128xf32>
    tpu.vector_store %arg5[%c1_76, %c0_77, %c0_78], %246 {strides = array<i32>} : memref<2x6x128xf32, #tpu.memory_space<vmem>>, vector<1x6x128xf32>,
    return
  }
  func.func @transform_0(%arg0: i32) -> (i32, i32, i32) {
    %c0_i32 = arith.constant 0 : i32
    %c0_i32_0 = arith.constant 0 : i32
    %c0_i32_1 = arith.constant 0 : i32
    return %arg0, %c0_i32, %c0_i32_0 : i32, i32, i32
  }
  func.func @transform_1(%arg0: i32) -> (i32, i32, i32) {
    %c0_i32 = arith.constant 0 : i32
    %c0_i32_0 = arith.constant 0 : i32
    %c0_i32_1 = arith.constant 0 : i32
    return %arg0, %c0_i32, %c0_i32_0 : i32, i32, i32
  }
  func.func @transform_2(%arg0: i32) -> (i32, i32, i32) {
    %c0_i32 = arith.constant 0 : i32
    %c0_i32_0 = arith.constant 0 : i32
    %c0_i32_1 = arith.constant 0 : i32
    return %arg0, %c0_i32, %c0_i32_0 : i32, i32, i32
  }
  func.func @transform_3(%arg0: i32) -> (i32, i32, i32, i32) {
    %c0_i32 = arith.constant 0 : i32
    %c0_i32_0 = arith.constant 0 : i32
    %c0_i32_1 = arith.constant 0 : i32
    %c0_i32_2 = arith.constant 0 : i32
    %c0_i32_3 = arith.constant 0 : i32
    return %c0_i32, %c0_i32_0, %c0_i32_1, %c0_i32_2 : i32, i32, i32, i32
  }
  func.func @transform_4(%arg0: i32) -> (i32, i32, i32) {
    %c0_i32 = arith.constant 0 : i32
    %c0_i32_0 = arith.constant 0 : i32
    %c0_i32_1 = arith.constant 0 : i32
    return %arg0, %c0_i32, %c0_i32_0 : i32, i32, i32
  }
}

module attributes {stable_mosaic.version = 11 : i64} {
  func.func @_encoder_kernel(%arg0: i32, %arg1: memref<2x16x32xf32, #tpu.memory_space<vmem>>, %arg2: memref<2x8x32xf32, #tpu.memory_space<vmem>>, %arg3: memref<2x16x8xf32, #tpu.memory_space<vmem>>, %arg4: memref<1x2x3x32xf32, #tpu.memory_space<vmem>>, %arg5: memref<2x24x32xf32, #tpu.memory_space<vmem>>) attributes {dimension_semantics = [#tpu.dimension_semantics<parallel>], iteration_bounds = array<i64: 1>, scalar_prefetch = 0 : i64, scratch_operands = 0 : i64, tpu.core_type = #tpu.core_type<tc>, window_params = [{transform_indices = @transform_0, window_bounds = array<i64: 2, 16, 32>}, {transform_indices = @transform_1, window_bounds = array<i64: 2, 8, 32>}, {transform_indices = @transform_2, window_bounds = array<i64: 2, 16, 8>}, {pipeline_mode = #tpu.pipeline_mode<synchronous>, transform_indices = @transform_3, window_bounds = array<i64: 1, 2, 3, 32>}, {transform_indices = @transform_4, window_bounds = array<i64: 2, 24, 32>}]} {
    %c0 = arith.constant 0 : index
    %c0_0 = arith.constant 0 : index
    %c0_1 = arith.constant 0 : index
    %c0_2 = arith.constant 0 : index
    %0 = vector.load %arg4[%c0, %c0_0, %c0_1, %c0_2] : memref<1x2x3x32xf32, #tpu.memory_space<vmem>>, vector<1x2x3x32xf32>
    %c0_3 = arith.constant 0 : index
    %c0_4 = arith.constant 0 : index
    %c0_5 = arith.constant 0 : index
    %1 = vector.load %arg1[%c0_3, %c0_4, %c0_5] : memref<2x16x32xf32, #tpu.memory_space<vmem>>, vector<1x16x32xf32>
    %2 = vector.shape_cast %1 : vector<1x16x32xf32> to vector<16x32xf32>
    %c0_6 = arith.constant 0 : index
    %c0_7 = arith.constant 0 : index
    %c0_8 = arith.constant 0 : index
    %3 = vector.load %arg2[%c0_6, %c0_7, %c0_8] : memref<2x8x32xf32, #tpu.memory_space<vmem>>, vector<1x8x32xf32>
    %4 = vector.shape_cast %3 : vector<1x8x32xf32> to vector<8x32xf32>
    %c0_9 = arith.constant 0 : index
    %c0_10 = arith.constant 0 : index
    %c0_11 = arith.constant 0 : index
    %5 = vector.load %arg3[%c0_9, %c0_10, %c0_11] : memref<2x16x8xf32, #tpu.memory_space<vmem>>, vector<1x16x8xf32>
    %6 = vector.shape_cast %5 : vector<1x16x8xf32> to vector<16x8xf32>
    %cst = arith.constant dense<0.000000e+00> : vector<16xf32>
    %7 = vector.multi_reduction <add>, %6, %cst [1] : vector<16x8xf32> to vector<16xf32>
    %8 = vector.shape_cast %7 : vector<16xf32> to vector<16x1xf32>
    %cst_12 = arith.constant 0.000000e+00 : f32
    %9 = vector.broadcast %cst_12 : f32 to vector<16x1xf32>
    %10 = arith.cmpf oeq, %8, %9 : vector<16x1xf32>
    %cst_13 = arith.constant 1.000000e+00 : f32
    %11 = vector.broadcast %cst_13 : f32 to vector<16x1xf32>
    %12 = arith.select %10, %11, %8 : vector<16x1xi1>, vector<16x1xf32>
    %cst_14 = arith.constant 1.000000e+00 : f32
    %13 = vector.broadcast %cst_14 : f32 to vector<16x1xf32>
    %14 = arith.divf %13, %12 : vector<16x1xf32>
    %cst_15 = arith.constant 1.000000e+00 : f32
    %15 = vector.broadcast %cst_15 : f32 to vector<16x1xf32>
    %cst_16 = arith.constant dense<0.000000e+00> : vector<8x1xf32>
    %16 = tpu.matmul %6, %15, %cst_16 {dimension_numbers = #tpu.dot_dimension_numbers<[0], [0], [1], [1], [0, 1, 1, 1], [], []>} : vector<16x8xf32>, vector<16x1xf32>, vector<8x1xf32> -> vector<8x1xf32>
    %cst_17 = arith.constant 0.000000e+00 : f32
    %17 = vector.broadcast %cst_17 : f32 to vector<8x1xf32>
    %18 = arith.cmpf oeq, %16, %17 : vector<8x1xf32>
    %cst_18 = arith.constant 1.000000e+00 : f32
    %19 = vector.broadcast %cst_18 : f32 to vector<8x1xf32>
    %20 = arith.select %18, %19, %16 : vector<8x1xi1>, vector<8x1xf32>
    %cst_19 = arith.constant 1.000000e+00 : f32
    %21 = vector.broadcast %cst_19 : f32 to vector<8x1xf32>
    %22 = arith.divf %21, %20 : vector<8x1xf32>
    %23 = vector.extract_strided_slice %0 {offsets = [0, 0, 0, 0], sizes = [1, 1, 3, 32], strides = [1, 1, 1, 1]} : vector<1x2x3x32xf32> to vector<1x1x3x32xf32>
    %24 = vector.shape_cast %23 : vector<1x1x3x32xf32> to vector<3x32xf32>
    %25 = vector.extract_strided_slice %0 {offsets = [0, 1, 0, 0], sizes = [1, 1, 3, 32], strides = [1, 1, 1, 1]} : vector<1x2x3x32xf32> to vector<1x1x3x32xf32>
    %26 = vector.shape_cast %25 : vector<1x1x3x32xf32> to vector<3x32xf32>
    %cst_20 = arith.constant dense<0.000000e+00> : vector<16x32xf32>
    %27 = tpu.matmul %6, %4, %cst_20 {dimension_numbers = #tpu.dot_dimension_numbers<[1], [0], [0], [1], [0, 0, 1, 1], [], []>} : vector<16x8xf32>, vector<8x32xf32>, vector<16x32xf32> -> vector<16x32xf32>
    %28 = vector.broadcast %14 : vector<16x1xf32> to vector<16x32xf32>
    %29 = arith.mulf %27, %28 : vector<16x32xf32>
    %30 = vector.extract_strided_slice %24 {offsets = [0, 0], sizes = [1, 32], strides = [1, 1]} : vector<3x32xf32> to vector<1x32xf32>
    %31 = vector.broadcast %30 : vector<1x32xf32> to vector<16x32xf32>
    %32 = arith.mulf %2, %31 : vector<16x32xf32>
    %cst_21 = arith.constant dense<0.000000e+00> : vector<16xf32>
    %33 = vector.multi_reduction <add>, %32, %cst_21 [1] : vector<16x32xf32> to vector<16xf32>
    %34 = vector.shape_cast %33 : vector<16xf32> to vector<16x1xf32>
    %35 = vector.extract_strided_slice %24 {offsets = [1, 0], sizes = [1, 32], strides = [1, 1]} : vector<3x32xf32> to vector<1x32xf32>
    %36 = vector.broadcast %35 : vector<1x32xf32> to vector<16x32xf32>
    %37 = arith.mulf %29, %36 : vector<16x32xf32>
    %38 = vector.extract_strided_slice %24 {offsets = [2, 0], sizes = [1, 32], strides = [1, 1]} : vector<3x32xf32> to vector<1x32xf32>
    %39 = vector.broadcast %38 : vector<1x32xf32> to vector<16x32xf32>
    %40 = arith.mulf %2, %39 : vector<16x32xf32>
    %41 = arith.addf %37, %40 : vector<16x32xf32>
    %cst_22 = arith.constant dense<0.000000e+00> : vector<16xf32>
    %42 = vector.multi_reduction <add>, %41, %cst_22 [1] : vector<16x32xf32> to vector<16xf32>
    %43 = vector.shape_cast %42 : vector<16xf32> to vector<16x1xf32>
    %cst_23 = arith.constant 0.000000e+00 : f32
    %44 = vector.broadcast %cst_23 : f32 to vector<16x1xf32>
    %45 = arith.cmpf ogt, %34, %44 : vector<16x1xf32>
    %46 = math.exp %34 : vector<16x1xf32>
    %cst_24 = arith.constant 1.000000e+00 : f32
    %47 = vector.broadcast %cst_24 : f32 to vector<16x1xf32>
    %48 = arith.subf %46, %47 : vector<16x1xf32>
    %49 = arith.select %45, %34, %48 : vector<16x1xi1>, vector<16x1xf32>
    %cst_25 = arith.constant 0.000000e+00 : f32
    %50 = vector.broadcast %cst_25 : f32 to vector<16x1xf32>
    %51 = arith.cmpf ogt, %43, %50 : vector<16x1xf32>
    %52 = math.exp %43 : vector<16x1xf32>
    %cst_26 = arith.constant 1.000000e+00 : f32
    %53 = vector.broadcast %cst_26 : f32 to vector<16x1xf32>
    %54 = arith.subf %52, %53 : vector<16x1xf32>
    %55 = arith.select %51, %43, %54 : vector<16x1xi1>, vector<16x1xf32>
    %56 = arith.maximumf %49, %55 : vector<16x1xf32>
    %57 = arith.subf %49, %56 : vector<16x1xf32>
    %58 = math.exp %57 : vector<16x1xf32>
    %59 = arith.subf %55, %56 : vector<16x1xf32>
    %60 = math.exp %59 : vector<16x1xf32>
    %61 = arith.addf %58, %60 : vector<16x1xf32>
    %cst_27 = arith.constant 1.000000e+00 : f32
    %62 = vector.broadcast %cst_27 : f32 to vector<16x1xf32>
    %63 = arith.divf %62, %61 : vector<16x1xf32>
    %64 = arith.mulf %58, %63 : vector<16x1xf32>
    %65 = vector.broadcast %64 : vector<16x1xf32> to vector<16x32xf32>
    %66 = arith.mulf %65, %2 : vector<16x32xf32>
    %67 = arith.mulf %60, %63 : vector<16x1xf32>
    %68 = vector.broadcast %67 : vector<16x1xf32> to vector<16x32xf32>
    %69 = arith.mulf %68, %29 : vector<16x32xf32>
    %70 = arith.addf %66, %69 : vector<16x32xf32>
    %cst_28 = arith.constant 0.000000e+00 : f32
    %71 = vector.broadcast %cst_28 : f32 to vector<16x32xf32>
    %72 = arith.maximumf %70, %71 : vector<16x32xf32>
    %cst_29 = arith.constant dense<0.000000e+00> : vector<8x32xf32>
    %73 = tpu.matmul %6, %2, %cst_29 {dimension_numbers = #tpu.dot_dimension_numbers<[0], [0], [1], [1], [0, 1, 1, 1], [], []>} : vector<16x8xf32>, vector<16x32xf32>, vector<8x32xf32> -> vector<8x32xf32>
    %74 = vector.broadcast %22 : vector<8x1xf32> to vector<8x32xf32>
    %75 = arith.mulf %73, %74 : vector<8x32xf32>
    %76 = vector.extract_strided_slice %26 {offsets = [0, 0], sizes = [1, 32], strides = [1, 1]} : vector<3x32xf32> to vector<1x32xf32>
    %77 = vector.broadcast %76 : vector<1x32xf32> to vector<8x32xf32>
    %78 = arith.mulf %4, %77 : vector<8x32xf32>
    %cst_30 = arith.constant dense<0.000000e+00> : vector<8xf32>
    %79 = vector.multi_reduction <add>, %78, %cst_30 [1] : vector<8x32xf32> to vector<8xf32>
    %80 = vector.shape_cast %79 : vector<8xf32> to vector<8x1xf32>
    %81 = vector.extract_strided_slice %26 {offsets = [1, 0], sizes = [1, 32], strides = [1, 1]} : vector<3x32xf32> to vector<1x32xf32>
    %82 = vector.broadcast %81 : vector<1x32xf32> to vector<8x32xf32>
    %83 = arith.mulf %75, %82 : vector<8x32xf32>
    %84 = vector.extract_strided_slice %26 {offsets = [2, 0], sizes = [1, 32], strides = [1, 1]} : vector<3x32xf32> to vector<1x32xf32>
    %85 = vector.broadcast %84 : vector<1x32xf32> to vector<8x32xf32>
    %86 = arith.mulf %4, %85 : vector<8x32xf32>
    %87 = arith.addf %83, %86 : vector<8x32xf32>
    %cst_31 = arith.constant dense<0.000000e+00> : vector<8xf32>
    %88 = vector.multi_reduction <add>, %87, %cst_31 [1] : vector<8x32xf32> to vector<8xf32>
    %89 = vector.shape_cast %88 : vector<8xf32> to vector<8x1xf32>
    %cst_32 = arith.constant 0.000000e+00 : f32
    %90 = vector.broadcast %cst_32 : f32 to vector<8x1xf32>
    %91 = arith.cmpf ogt, %80, %90 : vector<8x1xf32>
    %92 = math.exp %80 : vector<8x1xf32>
    %cst_33 = arith.constant 1.000000e+00 : f32
    %93 = vector.broadcast %cst_33 : f32 to vector<8x1xf32>
    %94 = arith.subf %92, %93 : vector<8x1xf32>
    %95 = arith.select %91, %80, %94 : vector<8x1xi1>, vector<8x1xf32>
    %cst_34 = arith.constant 0.000000e+00 : f32
    %96 = vector.broadcast %cst_34 : f32 to vector<8x1xf32>
    %97 = arith.cmpf ogt, %89, %96 : vector<8x1xf32>
    %98 = math.exp %89 : vector<8x1xf32>
    %cst_35 = arith.constant 1.000000e+00 : f32
    %99 = vector.broadcast %cst_35 : f32 to vector<8x1xf32>
    %100 = arith.subf %98, %99 : vector<8x1xf32>
    %101 = arith.select %97, %89, %100 : vector<8x1xi1>, vector<8x1xf32>
    %102 = arith.maximumf %95, %101 : vector<8x1xf32>
    %103 = arith.subf %95, %102 : vector<8x1xf32>
    %104 = math.exp %103 : vector<8x1xf32>
    %105 = arith.subf %101, %102 : vector<8x1xf32>
    %106 = math.exp %105 : vector<8x1xf32>
    %107 = arith.addf %104, %106 : vector<8x1xf32>
    %cst_36 = arith.constant 1.000000e+00 : f32
    %108 = vector.broadcast %cst_36 : f32 to vector<8x1xf32>
    %109 = arith.divf %108, %107 : vector<8x1xf32>
    %110 = arith.mulf %104, %109 : vector<8x1xf32>
    %111 = vector.broadcast %110 : vector<8x1xf32> to vector<8x32xf32>
    %112 = arith.mulf %111, %4 : vector<8x32xf32>
    %113 = arith.mulf %106, %109 : vector<8x1xf32>
    %114 = vector.broadcast %113 : vector<8x1xf32> to vector<8x32xf32>
    %115 = arith.mulf %114, %75 : vector<8x32xf32>
    %116 = arith.addf %112, %115 : vector<8x32xf32>
    %cst_37 = arith.constant 0.000000e+00 : f32
    %117 = vector.broadcast %cst_37 : f32 to vector<8x32xf32>
    %118 = arith.maximumf %116, %117 : vector<8x32xf32>
    %119 = tpu.concatenate %72, %118 in 0 : vector<16x32xf32>, vector<8x32xf32> -> vector<24x32xf32>
    %c0_38 = arith.constant 0 : index
    %c0_39 = arith.constant 0 : index
    %c0_40 = arith.constant 0 : index
    %120 = vector.load %arg5[%c0_38, %c0_39, %c0_40] : memref<2x24x32xf32, #tpu.memory_space<vmem>>, vector<1x24x32xf32>
    %121 = vector.shape_cast %120 : vector<1x24x32xf32> to vector<24x32xf32>
    %122 = vector.shape_cast %119 : vector<24x32xf32> to vector<1x24x32xf32>
    tpu.vector_store %arg5[%c0_38, %c0_39, %c0_40], %122 {strides = array<i32>} : memref<2x24x32xf32, #tpu.memory_space<vmem>>, vector<1x24x32xf32>,
    %c1 = arith.constant 1 : index
    %c0_41 = arith.constant 0 : index
    %c0_42 = arith.constant 0 : index
    %123 = vector.load %arg1[%c1, %c0_41, %c0_42] : memref<2x16x32xf32, #tpu.memory_space<vmem>>, vector<1x16x32xf32>
    %124 = vector.shape_cast %123 : vector<1x16x32xf32> to vector<16x32xf32>
    %c1_43 = arith.constant 1 : index
    %c0_44 = arith.constant 0 : index
    %c0_45 = arith.constant 0 : index
    %125 = vector.load %arg2[%c1_43, %c0_44, %c0_45] : memref<2x8x32xf32, #tpu.memory_space<vmem>>, vector<1x8x32xf32>
    %126 = vector.shape_cast %125 : vector<1x8x32xf32> to vector<8x32xf32>
    %c1_46 = arith.constant 1 : index
    %c0_47 = arith.constant 0 : index
    %c0_48 = arith.constant 0 : index
    %127 = vector.load %arg3[%c1_46, %c0_47, %c0_48] : memref<2x16x8xf32, #tpu.memory_space<vmem>>, vector<1x16x8xf32>
    %128 = vector.shape_cast %127 : vector<1x16x8xf32> to vector<16x8xf32>
    %cst_49 = arith.constant dense<0.000000e+00> : vector<16xf32>
    %129 = vector.multi_reduction <add>, %128, %cst_49 [1] : vector<16x8xf32> to vector<16xf32>
    %130 = vector.shape_cast %129 : vector<16xf32> to vector<16x1xf32>
    %cst_50 = arith.constant 0.000000e+00 : f32
    %131 = vector.broadcast %cst_50 : f32 to vector<16x1xf32>
    %132 = arith.cmpf oeq, %130, %131 : vector<16x1xf32>
    %cst_51 = arith.constant 1.000000e+00 : f32
    %133 = vector.broadcast %cst_51 : f32 to vector<16x1xf32>
    %134 = arith.select %132, %133, %130 : vector<16x1xi1>, vector<16x1xf32>
    %cst_52 = arith.constant 1.000000e+00 : f32
    %135 = vector.broadcast %cst_52 : f32 to vector<16x1xf32>
    %136 = arith.divf %135, %134 : vector<16x1xf32>
    %cst_53 = arith.constant 1.000000e+00 : f32
    %137 = vector.broadcast %cst_53 : f32 to vector<16x1xf32>
    %cst_54 = arith.constant dense<0.000000e+00> : vector<8x1xf32>
    %138 = tpu.matmul %128, %137, %cst_54 {dimension_numbers = #tpu.dot_dimension_numbers<[0], [0], [1], [1], [0, 1, 1, 1], [], []>} : vector<16x8xf32>, vector<16x1xf32>, vector<8x1xf32> -> vector<8x1xf32>
    %cst_55 = arith.constant 0.000000e+00 : f32
    %139 = vector.broadcast %cst_55 : f32 to vector<8x1xf32>
    %140 = arith.cmpf oeq, %138, %139 : vector<8x1xf32>
    %cst_56 = arith.constant 1.000000e+00 : f32
    %141 = vector.broadcast %cst_56 : f32 to vector<8x1xf32>
    %142 = arith.select %140, %141, %138 : vector<8x1xi1>, vector<8x1xf32>
    %cst_57 = arith.constant 1.000000e+00 : f32
    %143 = vector.broadcast %cst_57 : f32 to vector<8x1xf32>
    %144 = arith.divf %143, %142 : vector<8x1xf32>
    %145 = vector.extract_strided_slice %0 {offsets = [0, 0, 0, 0], sizes = [1, 1, 3, 32], strides = [1, 1, 1, 1]} : vector<1x2x3x32xf32> to vector<1x1x3x32xf32>
    %146 = vector.shape_cast %145 : vector<1x1x3x32xf32> to vector<3x32xf32>
    %147 = vector.extract_strided_slice %0 {offsets = [0, 1, 0, 0], sizes = [1, 1, 3, 32], strides = [1, 1, 1, 1]} : vector<1x2x3x32xf32> to vector<1x1x3x32xf32>
    %148 = vector.shape_cast %147 : vector<1x1x3x32xf32> to vector<3x32xf32>
    %cst_58 = arith.constant dense<0.000000e+00> : vector<16x32xf32>
    %149 = tpu.matmul %128, %126, %cst_58 {dimension_numbers = #tpu.dot_dimension_numbers<[1], [0], [0], [1], [0, 0, 1, 1], [], []>} : vector<16x8xf32>, vector<8x32xf32>, vector<16x32xf32> -> vector<16x32xf32>
    %150 = vector.broadcast %136 : vector<16x1xf32> to vector<16x32xf32>
    %151 = arith.mulf %149, %150 : vector<16x32xf32>
    %152 = vector.extract_strided_slice %146 {offsets = [0, 0], sizes = [1, 32], strides = [1, 1]} : vector<3x32xf32> to vector<1x32xf32>
    %153 = vector.broadcast %152 : vector<1x32xf32> to vector<16x32xf32>
    %154 = arith.mulf %124, %153 : vector<16x32xf32>
    %cst_59 = arith.constant dense<0.000000e+00> : vector<16xf32>
    %155 = vector.multi_reduction <add>, %154, %cst_59 [1] : vector<16x32xf32> to vector<16xf32>
    %156 = vector.shape_cast %155 : vector<16xf32> to vector<16x1xf32>
    %157 = vector.extract_strided_slice %146 {offsets = [1, 0], sizes = [1, 32], strides = [1, 1]} : vector<3x32xf32> to vector<1x32xf32>
    %158 = vector.broadcast %157 : vector<1x32xf32> to vector<16x32xf32>
    %159 = arith.mulf %151, %158 : vector<16x32xf32>
    %160 = vector.extract_strided_slice %146 {offsets = [2, 0], sizes = [1, 32], strides = [1, 1]} : vector<3x32xf32> to vector<1x32xf32>
    %161 = vector.broadcast %160 : vector<1x32xf32> to vector<16x32xf32>
    %162 = arith.mulf %124, %161 : vector<16x32xf32>
    %163 = arith.addf %159, %162 : vector<16x32xf32>
    %cst_60 = arith.constant dense<0.000000e+00> : vector<16xf32>
    %164 = vector.multi_reduction <add>, %163, %cst_60 [1] : vector<16x32xf32> to vector<16xf32>
    %165 = vector.shape_cast %164 : vector<16xf32> to vector<16x1xf32>
    %cst_61 = arith.constant 0.000000e+00 : f32
    %166 = vector.broadcast %cst_61 : f32 to vector<16x1xf32>
    %167 = arith.cmpf ogt, %156, %166 : vector<16x1xf32>
    %168 = math.exp %156 : vector<16x1xf32>
    %cst_62 = arith.constant 1.000000e+00 : f32
    %169 = vector.broadcast %cst_62 : f32 to vector<16x1xf32>
    %170 = arith.subf %168, %169 : vector<16x1xf32>
    %171 = arith.select %167, %156, %170 : vector<16x1xi1>, vector<16x1xf32>
    %cst_63 = arith.constant 0.000000e+00 : f32
    %172 = vector.broadcast %cst_63 : f32 to vector<16x1xf32>
    %173 = arith.cmpf ogt, %165, %172 : vector<16x1xf32>
    %174 = math.exp %165 : vector<16x1xf32>
    %cst_64 = arith.constant 1.000000e+00 : f32
    %175 = vector.broadcast %cst_64 : f32 to vector<16x1xf32>
    %176 = arith.subf %174, %175 : vector<16x1xf32>
    %177 = arith.select %173, %165, %176 : vector<16x1xi1>, vector<16x1xf32>
    %178 = arith.maximumf %171, %177 : vector<16x1xf32>
    %179 = arith.subf %171, %178 : vector<16x1xf32>
    %180 = math.exp %179 : vector<16x1xf32>
    %181 = arith.subf %177, %178 : vector<16x1xf32>
    %182 = math.exp %181 : vector<16x1xf32>
    %183 = arith.addf %180, %182 : vector<16x1xf32>
    %cst_65 = arith.constant 1.000000e+00 : f32
    %184 = vector.broadcast %cst_65 : f32 to vector<16x1xf32>
    %185 = arith.divf %184, %183 : vector<16x1xf32>
    %186 = arith.mulf %180, %185 : vector<16x1xf32>
    %187 = vector.broadcast %186 : vector<16x1xf32> to vector<16x32xf32>
    %188 = arith.mulf %187, %124 : vector<16x32xf32>
    %189 = arith.mulf %182, %185 : vector<16x1xf32>
    %190 = vector.broadcast %189 : vector<16x1xf32> to vector<16x32xf32>
    %191 = arith.mulf %190, %151 : vector<16x32xf32>
    %192 = arith.addf %188, %191 : vector<16x32xf32>
    %cst_66 = arith.constant 0.000000e+00 : f32
    %193 = vector.broadcast %cst_66 : f32 to vector<16x32xf32>
    %194 = arith.maximumf %192, %193 : vector<16x32xf32>
    %cst_67 = arith.constant dense<0.000000e+00> : vector<8x32xf32>
    %195 = tpu.matmul %128, %124, %cst_67 {dimension_numbers = #tpu.dot_dimension_numbers<[0], [0], [1], [1], [0, 1, 1, 1], [], []>} : vector<16x8xf32>, vector<16x32xf32>, vector<8x32xf32> -> vector<8x32xf32>
    %196 = vector.broadcast %144 : vector<8x1xf32> to vector<8x32xf32>
    %197 = arith.mulf %195, %196 : vector<8x32xf32>
    %198 = vector.extract_strided_slice %148 {offsets = [0, 0], sizes = [1, 32], strides = [1, 1]} : vector<3x32xf32> to vector<1x32xf32>
    %199 = vector.broadcast %198 : vector<1x32xf32> to vector<8x32xf32>
    %200 = arith.mulf %126, %199 : vector<8x32xf32>
    %cst_68 = arith.constant dense<0.000000e+00> : vector<8xf32>
    %201 = vector.multi_reduction <add>, %200, %cst_68 [1] : vector<8x32xf32> to vector<8xf32>
    %202 = vector.shape_cast %201 : vector<8xf32> to vector<8x1xf32>
    %203 = vector.extract_strided_slice %148 {offsets = [1, 0], sizes = [1, 32], strides = [1, 1]} : vector<3x32xf32> to vector<1x32xf32>
    %204 = vector.broadcast %203 : vector<1x32xf32> to vector<8x32xf32>
    %205 = arith.mulf %197, %204 : vector<8x32xf32>
    %206 = vector.extract_strided_slice %148 {offsets = [2, 0], sizes = [1, 32], strides = [1, 1]} : vector<3x32xf32> to vector<1x32xf32>
    %207 = vector.broadcast %206 : vector<1x32xf32> to vector<8x32xf32>
    %208 = arith.mulf %126, %207 : vector<8x32xf32>
    %209 = arith.addf %205, %208 : vector<8x32xf32>
    %cst_69 = arith.constant dense<0.000000e+00> : vector<8xf32>
    %210 = vector.multi_reduction <add>, %209, %cst_69 [1] : vector<8x32xf32> to vector<8xf32>
    %211 = vector.shape_cast %210 : vector<8xf32> to vector<8x1xf32>
    %cst_70 = arith.constant 0.000000e+00 : f32
    %212 = vector.broadcast %cst_70 : f32 to vector<8x1xf32>
    %213 = arith.cmpf ogt, %202, %212 : vector<8x1xf32>
    %214 = math.exp %202 : vector<8x1xf32>
    %cst_71 = arith.constant 1.000000e+00 : f32
    %215 = vector.broadcast %cst_71 : f32 to vector<8x1xf32>
    %216 = arith.subf %214, %215 : vector<8x1xf32>
    %217 = arith.select %213, %202, %216 : vector<8x1xi1>, vector<8x1xf32>
    %cst_72 = arith.constant 0.000000e+00 : f32
    %218 = vector.broadcast %cst_72 : f32 to vector<8x1xf32>
    %219 = arith.cmpf ogt, %211, %218 : vector<8x1xf32>
    %220 = math.exp %211 : vector<8x1xf32>
    %cst_73 = arith.constant 1.000000e+00 : f32
    %221 = vector.broadcast %cst_73 : f32 to vector<8x1xf32>
    %222 = arith.subf %220, %221 : vector<8x1xf32>
    %223 = arith.select %219, %211, %222 : vector<8x1xi1>, vector<8x1xf32>
    %224 = arith.maximumf %217, %223 : vector<8x1xf32>
    %225 = arith.subf %217, %224 : vector<8x1xf32>
    %226 = math.exp %225 : vector<8x1xf32>
    %227 = arith.subf %223, %224 : vector<8x1xf32>
    %228 = math.exp %227 : vector<8x1xf32>
    %229 = arith.addf %226, %228 : vector<8x1xf32>
    %cst_74 = arith.constant 1.000000e+00 : f32
    %230 = vector.broadcast %cst_74 : f32 to vector<8x1xf32>
    %231 = arith.divf %230, %229 : vector<8x1xf32>
    %232 = arith.mulf %226, %231 : vector<8x1xf32>
    %233 = vector.broadcast %232 : vector<8x1xf32> to vector<8x32xf32>
    %234 = arith.mulf %233, %126 : vector<8x32xf32>
    %235 = arith.mulf %228, %231 : vector<8x1xf32>
    %236 = vector.broadcast %235 : vector<8x1xf32> to vector<8x32xf32>
    %237 = arith.mulf %236, %197 : vector<8x32xf32>
    %238 = arith.addf %234, %237 : vector<8x32xf32>
    %cst_75 = arith.constant 0.000000e+00 : f32
    %239 = vector.broadcast %cst_75 : f32 to vector<8x32xf32>
    %240 = arith.maximumf %238, %239 : vector<8x32xf32>
    %241 = tpu.concatenate %194, %240 in 0 : vector<16x32xf32>, vector<8x32xf32> -> vector<24x32xf32>
    %c1_76 = arith.constant 1 : index
    %c0_77 = arith.constant 0 : index
    %c0_78 = arith.constant 0 : index
    %242 = vector.load %arg5[%c1_76, %c0_77, %c0_78] : memref<2x24x32xf32, #tpu.memory_space<vmem>>, vector<1x24x32xf32>
    %243 = vector.shape_cast %242 : vector<1x24x32xf32> to vector<24x32xf32>
    %244 = vector.shape_cast %241 : vector<24x32xf32> to vector<1x24x32xf32>
    tpu.vector_store %arg5[%c1_76, %c0_77, %c0_78], %244 {strides = array<i32>} : memref<2x24x32xf32, #tpu.memory_space<vmem>>, vector<1x24x32xf32>,
    return
  }
  func.func @transform_0(%arg0: i32) -> (i32, i32, i32) {
    %c0_i32 = arith.constant 0 : i32
    %c0_i32_0 = arith.constant 0 : i32
    %c0_i32_1 = arith.constant 0 : i32
    return %arg0, %c0_i32, %c0_i32_0 : i32, i32, i32
  }
  func.func @transform_1(%arg0: i32) -> (i32, i32, i32) {
    %c0_i32 = arith.constant 0 : i32
    %c0_i32_0 = arith.constant 0 : i32
    %c0_i32_1 = arith.constant 0 : i32
    return %arg0, %c0_i32, %c0_i32_0 : i32, i32, i32
  }
  func.func @transform_2(%arg0: i32) -> (i32, i32, i32) {
    %c0_i32 = arith.constant 0 : i32
    %c0_i32_0 = arith.constant 0 : i32
    %c0_i32_1 = arith.constant 0 : i32
    return %arg0, %c0_i32, %c0_i32_0 : i32, i32, i32
  }
  func.func @transform_3(%arg0: i32) -> (i32, i32, i32, i32) {
    %c0_i32 = arith.constant 0 : i32
    %c0_i32_0 = arith.constant 0 : i32
    %c0_i32_1 = arith.constant 0 : i32
    %c0_i32_2 = arith.constant 0 : i32
    %c0_i32_3 = arith.constant 0 : i32
    return %c0_i32, %c0_i32_0, %c0_i32_1, %c0_i32_2 : i32, i32, i32, i32
  }
  func.func @transform_4(%arg0: i32) -> (i32, i32, i32) {
    %c0_i32 = arith.constant 0 : i32
    %c0_i32_0 = arith.constant 0 : i32
    %c0_i32_1 = arith.constant 0 : i32
    return %arg0, %c0_i32, %c0_i32_0 : i32, i32, i32
  }
}

</mosaic_0001>

<llo_original>
// kernel: tpu_custom_call.1
$region0: #{tpu_custom_call.1}
  #allocation0 [shape = 'u32[]', space=smem, size = 0x4, offset = 0x4, fixed_abs, tag = 'smem constant byte address 0x4 - core index']
  #allocation1 [shape = 'u32[72,128]{1,0:T(1,128)}', space=vmem, size = 0x9000, scoped, tag = 'internal scratch']
  %s0 = inlined_call_operand.vmem [shape: f32[2,16,32], index: 0, kind: input, shape index: {}]
  %s1 = inlined_call_operand.vmem [shape: f32[2,8,32], index: 1, kind: input, shape index: {}]
  %s2 = inlined_call_operand.vmem [shape: f32[2,16,8], index: 2, kind: input, shape index: {}]
  %s3 = inlined_call_operand.vmem [shape: f32[1,2,3,32], index: 3, kind: input, shape index: {}]
  %s4 = inlined_call_operand.hbm [shape: f32[2,24,32], index: 4, kind: output, shape index: {}]
  %s5 = sld [smem:[#allocation0]]
  $region26: #{tpu_custom_call.1} parent=0
    _
  %s7 = ssub.s32 1, %s5
  %s8 = scalar_select 0, %s7, %s5
  $region1: #{tpu_custom_call.1} parent=0
    #allocation2 [shape = 'u8[24576]{0}', space=vmem, size = 0x6000, scoped, tag = 'output window, operand 0, single buffered']
    #allocation3 [shape = 's32[1]{0}', space=sflag, size = 0x4, scoped, tag = 'scoped memory for tpu_custom_call.1']
    %9 = vsyncpa [#allocation3], 0
    // Predicated region
    $region2: #{tpu_custom_call.1} parent=1 // pred_check
      _
    $region3: #{tpu_custom_call.1} parent=1 // pred_check_branch
      %11 = sbr.rel (0) target = $region5
    $region4: #{tpu_custom_call.1} parent=1 // pred_region
      _
    $region5: #{tpu_custom_call.1} parent=1 // pred_fallthru
      _
    // Predicated region
    $region6: #{tpu_custom_call.1} parent=1 // pred_check
      _
    $region7: #{tpu_custom_call.1} parent=1 // pred_check_branch
      %13 = sbr.rel (0) target = $region9
    $region8: #{tpu_custom_call.1} parent=1 // pred_region
      _
    $region9: #{tpu_custom_call.1} parent=1 // pred_fallthru
      _
    // Predicated region
    $region10: #{tpu_custom_call.1} parent=1 // pred_check
      _
    $region11: #{tpu_custom_call.1} parent=1 // pred_check_branch
      %15 = sbr.rel (0) target = $region13
    $region12: #{tpu_custom_call.1} parent=1 // pred_region
      _
    $region13: #{tpu_custom_call.1} parent=1 // pred_fallthru
      _
    // Predicated region
    $region14: #{tpu_custom_call.1} parent=1 // pred_check
      _
    $region15: #{tpu_custom_call.1} parent=1 // pred_check_branch
      %17 = sbr.rel (0) target = $region17
    $region16: #{tpu_custom_call.1} parent=1 // pred_region
      _
    $region17: #{tpu_custom_call.1} parent=1 // pred_fallthru
      _
    %v18 = vld [vmem:[%s3] sm:$0x7]
    %v19 = vld [vmem:[%s3 + $0x4] sm:$0x7]
    %v20 = vld [vmem:[%s0] sm:$0xff]
    %v21 = vld [vmem:[%s0 + $0x8] sm:$0xff]
    %v22 = vld [vmem:[%s1] sm:$0xff]
    %v23 = vld [vmem:[%s2] sm:$0xff]
    %v24 = vld [vmem:[%s2 + $0x8] sm:$0xff]
    %vm25 = vcmask 64512
    %v26 = vsel %vm25, %v23, 0.0
    %27 = vadd.xlane.f32.xlu0 %v26
    %v28 = vpop.xlane.xlu0 %27
    %v29 = vsel %vm25, %v24, 0.0
    %30 = vadd.xlane.f32.xlu0 %v29
    %v31 = vpop.xlane.xlu0 %30
    %vm32 = vcmp.eq.f32.partialorder %v28, 0.0
    %vm33 = vcmp.eq.f32.partialorder %v31, 0.0
    %v34 = vsel %vm32, 1.0, %v28
    %v35 = vsel %vm33, 1.0, %v31
    %v36 = vrcp.pop %v34
    %v37 = vmul.f32 %v34, %v36
    %v38 = vsub.f32 1.0, %v37
    %v39 = vmul.f32 %v36, %v38
    %v40 = vadd.f32 %v36, %v39
    %vm41 = vweird.f32 %v34
    %vm42 = vweird.f32 %v36
    %vm43 = vmor %vm41, %vm42
    %v44 = vsel %vm43, %v36, %v40
    %v45 = vand.u32 2147483647, %v34
    %vm46 = vcmp.eq.f32.partialorder %v45, 8.507059e+37
    %v47 = vand.u32 %v34, 2147483648
    %v48 = vor.u32 1.1754944e-38, %v47
    %v49 = vsel %vm46, %v48, %v44
    %v50 = vmul.f32 1.0, %v49
    %v51 = vrcp.pop %v35
    %v52 = vmul.f32 %v35, %v51
    %v53 = vsub.f32 1.0, %v52
    %v54 = vmul.f32 %v51, %v53
    %v55 = vadd.f32 %v51, %v54
    %vm56 = vweird.f32 %v35
    %vm57 = vweird.f32 %v51
    %vm58 = vmor %vm56, %vm57
    %v59 = vsel %vm58, %v51, %v55
    %v60 = vand.u32 2147483647, %v35
    %vm61 = vcmp.eq.f32.partialorder %v60, 8.507059e+37
    %v62 = vand.u32 %v35, 2147483648
    %v63 = vor.u32 1.1754944e-38, %v62
    %v64 = vsel %vm61, %v63, %v59
    %v65 = vmul.f32 1.0, %v64
    %66 = vxpose.xlu0.b32.start [1/16] %v23, 128
    %67 = vxpose.xlu0.b32.cont [2/16] %v24, 128
    %68 = vxpose.xlu0.b32.cont [3/16] 0.0, 128
    %69 = vxpose.xlu0.b32.cont [4/16] 0.0, 128
    %70 = vxpose.xlu0.b32.cont [5/16] 0.0, 128
    %71 = vxpose.xlu0.b32.cont [6/16] 0.0, 128
    %72 = vxpose.xlu0.b32.cont [7/16] 0.0, 128
    %73 = vxpose.xlu0.b32.cont [8/16] 0.0, 128
    %74 = vxpose.xlu0.b32.cont [9/16] 0.0, 128
    %75 = vxpose.xlu0.b32.cont [10/16] 0.0, 128
    %76 = vxpose.xlu0.b32.cont [11/16] 0.0, 128
    %77 = vxpose.xlu0.b32.cont [12/16] 0.0, 128
    %78 = vxpose.xlu0.b32.cont [13/16] 0.0, 128
    %79 = vxpose.xlu0.b32.cont [14/16] 0.0, 128
    %80 = vxpose.xlu0.b32.cont [15/16] 0.0, 128
    %81 = vxpose.xlu0.b32.end [16/16] 0.0, 128
    %v82 = vpop.trf.xlu0
    %v83 = vpop.trf.xlu0
    %v84 = vpop.trf.xlu0
    %v85 = vpop.trf.xlu0
    %v86 = vpop.trf.xlu0
    %v87 = vpop.trf.xlu0
    %v88 = vpop.trf.xlu0
    %v89 = vpop.trf.xlu0
    %v90 = vpop.trf.xlu0
    %v91 = vpop.trf.xlu0
    %v92 = vpop.trf.xlu0
    %v93 = vpop.trf.xlu0
    %v94 = vpop.trf.xlu0
    %v95 = vpop.trf.xlu0
    %v96 = vpop.trf.xlu0
    %v97 = vpop.trf.xlu0
    %vm98 = vcmask 130048
    %v100 = vsel %vm98, %v82, 0
    %102 = vmatpush.msra.mxu0 0.0
    %103 = vmatpush.msra.mxu0 0.0
    %104 = vmatpush.msra.mxu0 0.0
    %105 = vmatpush.msra.mxu0 0.0
    %106 = vmatpush.msra.mxu0 0.0
    %107 = vmatpush.msra.mxu0 0.0
    %108 = vmatpush.msra.mxu0 0.0
    %109 = vmatpush.msra.mxu0 0.0
    %110 = vmatpush.msra.mxu0 0.0
    %111 = vmatpush.msra.mxu0 0.0
    %112 = vmatpush.msra.mxu0 0.0
    %113 = vmatpush.msra.mxu0 0.0
    %114 = vmatpush.msra.mxu0 0.0
    %115 = vmatpush.msra.mxu0 0.0
    %116 = vmatpush.msra.mxu0 1.0
    %117 = vmatpush.msra.mxu0 1.0
    %118 = vmatmul.f32.gmra.mxu0 %v100
    %v119 = vpop.f32.mrf.mxu0
    %v120 = vadd.f32 0.0, %v119
    %121 = vdwg.mxu0
    %vm122 = vcmp.eq.f32.partialorder %v120, 0.0
    %v123 = vsel %vm122, 1.0, %v120
    %v124 = vrcp.pop %v123
    %v125 = vmul.f32 %v123, %v124
    %v126 = vsub.f32 1.0, %v125
    %v127 = vmul.f32 %v124, %v126
    %v128 = vadd.f32 %v124, %v127
    %vm129 = vweird.f32 %v123
    %vm130 = vweird.f32 %v124
    %vm131 = vmor %vm129, %vm130
    %v132 = vsel %vm131, %v124, %v128
    %v133 = vand.u32 2147483647, %v123
    %vm134 = vcmp.eq.f32.partialorder %v133, 8.507059e+37
    %v135 = vand.u32 %v123, 2147483648
    %v136 = vor.u32 1.1754944e-38, %v135
    %v137 = vsel %vm134, %v136, %v132
    %v138 = vmul.f32 1.0, %v137
    %v140 = vsel %vm25, %v23, 0
    %v143 = vsel %vm25, %v24, 0
    %145 = vmatpush.msra.mxu0 0.0
    %146 = vmatpush.msra.mxu0 0.0
    %147 = vmatpush.msra.mxu0 0.0
    %148 = vmatpush.msra.mxu0 0.0
    %149 = vmatpush.msra.mxu0 0.0
    %150 = vmatpush.msra.mxu0 0.0
    %151 = vmatpush.msra.mxu0 0.0
    %152 = vmatpush.msra.mxu0 0.0
    %153 = vmatpush.msra.mxu0 0.0
    %154 = vmatpush.msra.mxu0 0.0
    %155 = vmatpush.msra.mxu0 0.0
    %156 = vmatpush.msra.mxu0 0.0
    %157 = vmatpush.msra.mxu0 0.0
    %158 = vmatpush.msra.mxu0 0.0
    %159 = vmatpush.msra.mxu0 0.0
    %160 = vmatpush.msra.mxu0 %v22
    %161 = vmatmul.f32.gmra.mxu0 %v140
    %v162 = vpop.f32.mrf.mxu0
    %v163 = vadd.f32 0.0, %v162
    %164 = vmatmul.f32.gmra.mxu0 %v143
    %v165 = vpop.f32.mrf.mxu0
    %v166 = vadd.f32 0.0, %v165
    %167 = vdwg.mxu0
    %v168 = vmul.f32 %v163, %v50
    %v169 = vmul.f32 %v166, %v65
    %v170 = vperm.slane %v18, 0
    %v171 = vmul.f32 %v20, %v170
    %v172 = vmul.f32 %v21, %v170
    %vm173 = vcmask 261120
    %v174 = vsel %vm173, %v171, 0.0
    %175 = vadd.xlane.f32.xlu0 %v174
    %v176 = vpop.xlane.xlu0 %175
    %v177 = vsel %vm173, %v172, 0.0
    %178 = vadd.xlane.f32.xlu0 %v177
    %v179 = vpop.xlane.xlu0 %178
    %v180 = vperm.slane %v18, 1
    %v181 = vmul.f32 %v168, %v180
    %v182 = vmul.f32 %v169, %v180
    %v183 = vperm.slane %v18, 2
    %v184 = vmul.f32 %v20, %v183
    %v185 = vmul.f32 %v21, %v183
    %v186 = vadd.f32 %v181, %v184
    %v187 = vadd.f32 %v182, %v185
    %v188 = vsel %vm173, %v186, 0.0
    %189 = vadd.xlane.f32.xlu0 %v188
    %v190 = vpop.xlane.xlu0 %189
    %v191 = vsel %vm173, %v187, 0.0
    %192 = vadd.xlane.f32.xlu0 %v191
    %v193 = vpop.xlane.xlu0 %192
    %vm194 = vcmp.gt.f32.partialorder %v176, 0.0
    %vm195 = vcmp.gt.f32.partialorder %v179, 0.0
    %v196 = vmul.f32 %v176, 1.442695
    %v197 = vpow.pop %v196
    %v198 = vmul.f32 %v179, 1.442695
    %v199 = vpow.pop %v198
    %v200 = vsub.f32 %v197, 1.0
    %v201 = vsub.f32 %v199, 1.0
    %v202 = vsel %vm194, %v176, %v200
    %v203 = vsel %vm195, %v179, %v201
    %vm204 = vcmp.gt.f32.partialorder %v190, 0.0
    %vm205 = vcmp.gt.f32.partialorder %v193, 0.0
    %v206 = vmul.f32 %v190, 1.442695
    %v207 = vpow.pop %v206
    %v208 = vmul.f32 %v193, 1.442695
    %v209 = vpow.pop %v208
    %v210 = vsub.f32 %v207, 1.0
    %v211 = vsub.f32 %v209, 1.0
    %v212 = vsel %vm204, %v190, %v210
    %v213 = vsel %vm205, %v193, %v211
    %v214 = vmax.f32 %v202, %v212
    %v215 = vmax.f32 %v203, %v213
    %v216 = vsub.f32 %v202, %v214
    %v217 = vsub.f32 %v203, %v215
    %v218 = vmul.f32 %v216, 1.442695
    %v219 = vpow.pop %v218
    %v220 = vmul.f32 %v217, 1.442695
    %v221 = vpow.pop %v220
    %v222 = vsub.f32 %v212, %v214
    %v223 = vsub.f32 %v213, %v215
    %v224 = vmul.f32 %v222, 1.442695
    %v225 = vpow.pop %v224
    %v226 = vmul.f32 %v223, 1.442695
    %v227 = vpow.pop %v226
    %v228 = vadd.f32 %v219, %v225
    %v229 = vadd.f32 %v221, %v227
    %v230 = vrcp.pop %v228
    %v231 = vmul.f32 %v228, %v230
    %v232 = vsub.f32 1.0, %v231
    %v233 = vmul.f32 %v230, %v232
    %v234 = vadd.f32 %v230, %v233
    %vm235 = vweird.f32 %v228
    %vm236 = vweird.f32 %v230
    %vm237 = vmor %vm235, %vm236
    %v238 = vsel %vm237, %v230, %v234
    %v239 = vand.u32 2147483647, %v228
    %vm240 = vcmp.eq.f32.partialorder %v239, 8.507059e+37
    %v241 = vand.u32 %v228, 2147483648
    %v242 = vor.u32 1.1754944e-38, %v241
    %v243 = vsel %vm240, %v242, %v238
    %v244 = vmul.f32 1.0, %v243
    %v245 = vrcp.pop %v229
    %v246 = vmul.f32 %v229, %v245
    %v247 = vsub.f32 1.0, %v246
    %v248 = vmul.f32 %v245, %v247
    %v249 = vadd.f32 %v245, %v248
    %vm250 = vweird.f32 %v229
    %vm251 = vweird.f32 %v245
    %vm252 = vmor %vm250, %vm251
    %v253 = vsel %vm252, %v245, %v249
    %v254 = vand.u32 2147483647, %v229
    %vm255 = vcmp.eq.f32.partialorder %v254, 8.507059e+37
    %v256 = vand.u32 %v229, 2147483648
    %v257 = vor.u32 1.1754944e-38, %v256
    %v258 = vsel %vm255, %v257, %v253
    %v259 = vmul.f32 1.0, %v258
    %v260 = vmul.f32 %v219, %v244
    %v261 = vmul.f32 %v221, %v259
    %v262 = vmul.f32 %v260, %v20
    %v263 = vmul.f32 %v261, %v21
    %v264 = vmul.f32 %v225, %v244
    %v265 = vmul.f32 %v227, %v259
    %v266 = vmul.f32 %v264, %v168
    %v267 = vmul.f32 %v265, %v169
    %v268 = vadd.f32 %v262, %v266
    %v269 = vadd.f32 %v263, %v267
    %v270 = vmax.f32 %v268, 0.0
    %v271 = vmax.f32 %v269, 0.0
    %272 = vmatpush.msra.mxu0 0.0
    %273 = vmatpush.msra.mxu0 0.0
    %274 = vmatpush.msra.mxu0 0.0
    %275 = vmatpush.msra.mxu0 0.0
    %276 = vmatpush.msra.mxu0 0.0
    %277 = vmatpush.msra.mxu0 0.0
    %278 = vmatpush.msra.mxu0 0.0
    %279 = vmatpush.msra.mxu0 0.0
    %280 = vmatpush.msra.mxu0 0.0
    %281 = vmatpush.msra.mxu0 0.0
    %282 = vmatpush.msra.mxu0 0.0
    %283 = vmatpush.msra.mxu0 0.0
    %284 = vmatpush.msra.mxu0 0.0
    %285 = vmatpush.msra.mxu0 0.0
    %286 = vmatpush.msra.mxu0 %v21
    %287 = vmatpush.msra.mxu0 %v20
    %288 = vmatmul.f32.gmra.mxu0 %v100
    %v289 = vpop.f32.mrf.mxu0
    %v290 = vadd.f32 0.0, %v289
    %291 = vdwg.mxu0
    %293 = vset.pattern.permute.xlu0 0
    %294 = vperm.xlu0 %293, %v138
    %v295 = vpop.permute.xlu0 %294
    %v297 = vmul.f32 %v290, %v295
    %v298 = vperm.slane %v19, 0
    %v299 = vmul.f32 %v22, %v298
    %v300 = vsel %vm173, %v299, 0.0
    %301 = vadd.xlane.f32.xlu0 %v300
    %v302 = vpop.xlane.xlu0 %301
    %v303 = vperm.slane %v19, 1
    %v304 = vmul.f32 %v297, %v303
    %v305 = vperm.slane %v19, 2
    %v306 = vmul.f32 %v22, %v305
    %v307 = vadd.f32 %v304, %v306
    %v308 = vsel %vm173, %v307, 0.0
    %309 = vadd.xlane.f32.xlu0 %v308
    %v310 = vpop.xlane.xlu0 %309
    %vm311 = vcmp.gt.f32.partialorder %v302, 0.0
    %v312 = vmul.f32 %v302, 1.442695
    %v313 = vpow.pop %v312
    %v314 = vsub.f32 %v313, 1.0
    %v315 = vsel %vm311, %v302, %v314
    %vm316 = vcmp.gt.f32.partialorder %v310, 0.0
    %v317 = vmul.f32 %v310, 1.442695
    %v318 = vpow.pop %v317
    %v319 = vsub.f32 %v318, 1.0
    %v320 = vsel %vm316, %v310, %v319
    %v321 = vmax.f32 %v315, %v320
    %v322 = vsub.f32 %v315, %v321
    %v323 = vmul.f32 %v322, 1.442695
    %v324 = vpow.pop %v323
    %v325 = vsub.f32 %v320, %v321
    %v326 = vmul.f32 %v325, 1.442695
    %v327 = vpow.pop %v326
    %v328 = vadd.f32 %v324, %v327
    %v329 = vrcp.pop %v328
    %v330 = vmul.f32 %v328, %v329
    %v331 = vsub.f32 1.0, %v330
    %v332 = vmul.f32 %v329, %v331
    %v333 = vadd.f32 %v329, %v332
    %vm334 = vweird.f32 %v328
    %vm335 = vweird.f32 %v329
    %vm336 = vmor %vm334, %vm335
    %v337 = vsel %vm336, %v329, %v333
    %v338 = vand.u32 2147483647, %v328
    %vm339 = vcmp.eq.f32.partialorder %v338, 8.507059e+37
    %v340 = vand.u32 %v328, 2147483648
    %v341 = vor.u32 1.1754944e-38, %v340
    %v342 = vsel %vm339, %v341, %v337
    %v343 = vmul.f32 1.0, %v342
    %v344 = vmul.f32 %v324, %v343
    %v345 = vmul.f32 %v344, %v22
    %v346 = vmul.f32 %v327, %v343
    %v347 = vmul.f32 %v346, %v297
    %v348 = vadd.f32 %v345, %v347
    %v349 = vmax.f32 %v348, 0.0
    %350 = vst.msk [vmem:[#allocation2] sm:$0xff] %vm173, %v270
    %351 = vst.msk [vmem:[#allocation2 + $0x8] sm:$0xff] %vm173, %v271
    %352 = vst.msk [vmem:[#allocation2 + $0x10] sm:$0xff] %vm173, %v349
    %s353 = scalar_lea.vmem %s0, 16
    %v354 = vld [vmem:[%s353] sm:$0xff]
    %v355 = vld [vmem:[%s353 + $0x8] sm:$0xff]
    %s356 = scalar_lea.vmem %s1, 8
    %v357 = vld [vmem:[%s356] sm:$0xff]
    %s358 = scalar_lea.vmem %s2, 16
    %v359 = vld [vmem:[%s358] sm:$0xff]
    %v360 = vld [vmem:[%s358 + $0x8] sm:$0xff]
    %v361 = vsel %vm25, %v359, 0.0
    %362 = vadd.xlane.f32.xlu0 %v361
    %v363 = vpop.xlane.xlu0 %362
    %v364 = vsel %vm25, %v360, 0.0
    %365 = vadd.xlane.f32.xlu0 %v364
    %v366 = vpop.xlane.xlu0 %365
    %vm367 = vcmp.eq.f32.partialorder %v363, 0.0
    %vm368 = vcmp.eq.f32.partialorder %v366, 0.0
    %v369 = vsel %vm367, 1.0, %v363
    %v370 = vsel %vm368, 1.0, %v366
    %v371 = vrcp.pop %v369
    %v372 = vmul.f32 %v369, %v371
    %v373 = vsub.f32 1.0, %v372
    %v374 = vmul.f32 %v371, %v373
    %v375 = vadd.f32 %v371, %v374
    %vm376 = vweird.f32 %v369
    %vm377 = vweird.f32 %v371
    %vm378 = vmor %vm376, %vm377
    %v379 = vsel %vm378, %v371, %v375
    %v380 = vand.u32 2147483647, %v369
    %vm381 = vcmp.eq.f32.partialorder %v380, 8.507059e+37
    %v382 = vand.u32 %v369, 2147483648
    %v383 = vor.u32 1.1754944e-38, %v382
    %v384 = vsel %vm381, %v383, %v379
    %v385 = vmul.f32 1.0, %v384
    %v386 = vrcp.pop %v370
    %v387 = vmul.f32 %v370, %v386
    %v388 = vsub.f32 1.0, %v387
    %v389 = vmul.f32 %v386, %v388
    %v390 = vadd.f32 %v386, %v389
    %vm391 = vweird.f32 %v370
    %vm392 = vweird.f32 %v386
    %vm393 = vmor %vm391, %vm392
    %v394 = vsel %vm393, %v386, %v390
    %v395 = vand.u32 2147483647, %v370
    %vm396 = vcmp.eq.f32.partialorder %v395, 8.507059e+37
    %v397 = vand.u32 %v370, 2147483648
    %v398 = vor.u32 1.1754944e-38, %v397
    %v399 = vsel %vm396, %v398, %v394
    %v400 = vmul.f32 1.0, %v399
    %401 = vxpose.xlu0.b32.start [1/16] %v359, 128
    %402 = vxpose.xlu0.b32.cont [2/16] %v360, 128
    %403 = vxpose.xlu0.b32.cont [3/16] 0.0, 128
    %404 = vxpose.xlu0.b32.cont [4/16] 0.0, 128
    %405 = vxpose.xlu0.b32.cont [5/16] 0.0, 128
    %406 = vxpose.xlu0.b32.cont [6/16] 0.0, 128
    %407 = vxpose.xlu0.b32.cont [7/16] 0.0, 128
    %408 = vxpose.xlu0.b32.cont [8/16] 0.0, 128
    %409 = vxpose.xlu0.b32.cont [9/16] 0.0, 128
    %410 = vxpose.xlu0.b32.cont [10/16] 0.0, 128
    %411 = vxpose.xlu0.b32.cont [11/16] 0.0, 128
    %412 = vxpose.xlu0.b32.cont [12/16] 0.0, 128
    %413 = vxpose.xlu0.b32.cont [13/16] 0.0, 128
    %414 = vxpose.xlu0.b32.cont [14/16] 0.0, 128
    %415 = vxpose.xlu0.b32.cont [15/16] 0.0, 128
    %416 = vxpose.xlu0.b32.end [16/16] 0.0, 128
    %v417 = vpop.trf.xlu0
    %v418 = vpop.trf.xlu0
    %v419 = vpop.trf.xlu0
    %v420 = vpop.trf.xlu0
    %v421 = vpop.trf.xlu0
    %v422 = vpop.trf.xlu0
    %v423 = vpop.trf.xlu0
    %v424 = vpop.trf.xlu0
    %v425 = vpop.trf.xlu0
    %v426 = vpop.trf.xlu0
    %v427 = vpop.trf.xlu0
    %v428 = vpop.trf.xlu0
    %v429 = vpop.trf.xlu0
    %v430 = vpop.trf.xlu0
    %v431 = vpop.trf.xlu0
    %v432 = vpop.trf.xlu0
    %v434 = vsel %vm98, %v417, 0
    %436 = vmatpush.msra.mxu0 0.0
    %437 = vmatpush.msra.mxu0 0.0
    %438 = vmatpush.msra.mxu0 0.0
    %439 = vmatpush.msra.mxu0 0.0
    %440 = vmatpush.msra.mxu0 0.0
    %441 = vmatpush.msra.mxu0 0.0
    %442 = vmatpush.msra.mxu0 0.0
    %443 = vmatpush.msra.mxu0 0.0
    %444 = vmatpush.msra.mxu0 0.0
    %445 = vmatpush.msra.mxu0 0.0
    %446 = vmatpush.msra.mxu0 0.0
    %447 = vmatpush.msra.mxu0 0.0
    %448 = vmatpush.msra.mxu0 0.0
    %449 = vmatpush.msra.mxu0 0.0
    %450 = vmatpush.msra.mxu0 1.0
    %451 = vmatpush.msra.mxu0 1.0
    %452 = vmatmul.f32.gmra.mxu0 %v434
    %v453 = vpop.f32.mrf.mxu0
    %v454 = vadd.f32 0.0, %v453
    %455 = vdwg.mxu0
    %vm456 = vcmp.eq.f32.partialorder %v454, 0.0
    %v457 = vsel %vm456, 1.0, %v454
    %v458 = vrcp.pop %v457
    %v459 = vmul.f32 %v457, %v458
    %v460 = vsub.f32 1.0, %v459
    %v461 = vmul.f32 %v458, %v460
    %v462 = vadd.f32 %v458, %v461
    %vm463 = vweird.f32 %v457
    %vm464 = vweird.f32 %v458
    %vm465 = vmor %vm463, %vm464
    %v466 = vsel %vm465, %v458, %v462
    %v467 = vand.u32 2147483647, %v457
    %vm468 = vcmp.eq.f32.partialorder %v467, 8.507059e+37
    %v469 = vand.u32 %v457, 2147483648
    %v470 = vor.u32 1.1754944e-38, %v469
    %v471 = vsel %vm468, %v470, %v466
    %v472 = vmul.f32 1.0, %v471
    %v474 = vsel %vm25, %v359, 0
    %v477 = vsel %vm25, %v360, 0
    %479 = vmatpush.msra.mxu0 0.0
    %480 = vmatpush.msra.mxu0 0.0
    %481 = vmatpush.msra.mxu0 0.0
    %482 = vmatpush.msra.mxu0 0.0
    %483 = vmatpush.msra.mxu0 0.0
    %484 = vmatpush.msra.mxu0 0.0
    %485 = vmatpush.msra.mxu0 0.0
    %486 = vmatpush.msra.mxu0 0.0
    %487 = vmatpush.msra.mxu0 0.0
    %488 = vmatpush.msra.mxu0 0.0
    %489 = vmatpush.msra.mxu0 0.0
    %490 = vmatpush.msra.mxu0 0.0
    %491 = vmatpush.msra.mxu0 0.0
    %492 = vmatpush.msra.mxu0 0.0
    %493 = vmatpush.msra.mxu0 0.0
    %494 = vmatpush.msra.mxu0 %v357
    %495 = vmatmul.f32.gmra.mxu0 %v474
    %v496 = vpop.f32.mrf.mxu0
    %v497 = vadd.f32 0.0, %v496
    %498 = vmatmul.f32.gmra.mxu0 %v477
    %v499 = vpop.f32.mrf.mxu0
    %v500 = vadd.f32 0.0, %v499
    %501 = vdwg.mxu0
    %v502 = vmul.f32 %v497, %v385
    %v503 = vmul.f32 %v500, %v400
    %v504 = vmul.f32 %v354, %v170
    %v505 = vmul.f32 %v355, %v170
    %v506 = vsel %vm173, %v504, 0.0
    %507 = vadd.xlane.f32.xlu0 %v506
    %v508 = vpop.xlane.xlu0 %507
    %v509 = vsel %vm173, %v505, 0.0
    %510 = vadd.xlane.f32.xlu0 %v509
    %v511 = vpop.xlane.xlu0 %510
    %v512 = vmul.f32 %v502, %v180
    %v513 = vmul.f32 %v503, %v180
    %v514 = vmul.f32 %v354, %v183
    %v515 = vmul.f32 %v355, %v183
    %v516 = vadd.f32 %v512, %v514
    %v517 = vadd.f32 %v513, %v515
    %v518 = vsel %vm173, %v516, 0.0
    %519 = vadd.xlane.f32.xlu0 %v518
    %v520 = vpop.xlane.xlu0 %519
    %v521 = vsel %vm173, %v517, 0.0
    %522 = vadd.xlane.f32.xlu0 %v521
    %v523 = vpop.xlane.xlu0 %522
    %vm524 = vcmp.gt.f32.partialorder %v508, 0.0
    %vm525 = vcmp.gt.f32.partialorder %v511, 0.0
    %v526 = vmul.f32 %v508, 1.442695
    %v527 = vpow.pop %v526
    %v528 = vmul.f32 %v511, 1.442695
    %v529 = vpow.pop %v528
    %v530 = vsub.f32 %v527, 1.0
    %v531 = vsub.f32 %v529, 1.0
    %v532 = vsel %vm524, %v508, %v530
    %v533 = vsel %vm525, %v511, %v531
    %vm534 = vcmp.gt.f32.partialorder %v520, 0.0
    %vm535 = vcmp.gt.f32.partialorder %v523, 0.0
    %v536 = vmul.f32 %v520, 1.442695
    %v537 = vpow.pop %v536
    %v538 = vmul.f32 %v523, 1.442695
    %v539 = vpow.pop %v538
    %v540 = vsub.f32 %v537, 1.0
    %v541 = vsub.f32 %v539, 1.0
    %v542 = vsel %vm534, %v520, %v540
    %v543 = vsel %vm535, %v523, %v541
    %v544 = vmax.f32 %v532, %v542
    %v545 = vmax.f32 %v533, %v543
    %v546 = vsub.f32 %v532, %v544
    %v547 = vsub.f32 %v533, %v545
    %v548 = vmul.f32 %v546, 1.442695
    %v549 = vpow.pop %v548
    %v550 = vmul.f32 %v547, 1.442695
    %v551 = vpow.pop %v550
    %v552 = vsub.f32 %v542, %v544
    %v553 = vsub.f32 %v543, %v545
    %v554 = vmul.f32 %v552, 1.442695
    %v555 = vpow.pop %v554
    %v556 = vmul.f32 %v553, 1.442695
    %v557 = vpow.pop %v556
    %v558 = vadd.f32 %v549, %v555
    %v559 = vadd.f32 %v551, %v557
    %v560 = vrcp.pop %v558
    %v561 = vmul.f32 %v558, %v560
    %v562 = vsub.f32 1.0, %v561
    %v563 = vmul.f32 %v560, %v562
    %v564 = vadd.f32 %v560, %v563
    %vm565 = vweird.f32 %v558
    %vm566 = vweird.f32 %v560
    %vm567 = vmor %vm565, %vm566
    %v568 = vsel %vm567, %v560, %v564
    %v569 = vand.u32 2147483647, %v558
    %vm570 = vcmp.eq.f32.partialorder %v569, 8.507059e+37
    %v571 = vand.u32 %v558, 2147483648
    %v572 = vor.u32 1.1754944e-38, %v571
    %v573 = vsel %vm570, %v572, %v568
    %v574 = vmul.f32 1.0, %v573
    %v575 = vrcp.pop %v559
    %v576 = vmul.f32 %v559, %v575
    %v577 = vsub.f32 1.0, %v576
    %v578 = vmul.f32 %v575, %v577
    %v579 = vadd.f32 %v575, %v578
    %vm580 = vweird.f32 %v559
    %vm581 = vweird.f32 %v575
    %vm582 = vmor %vm580, %vm581
    %v583 = vsel %vm582, %v575, %v579
    %v584 = vand.u32 2147483647, %v559
    %vm585 = vcmp.eq.f32.partialorder %v584, 8.507059e+37
    %v586 = vand.u32 %v559, 2147483648
    %v587 = vor.u32 1.1754944e-38, %v586
    %v588 = vsel %vm585, %v587, %v583
    %v589 = vmul.f32 1.0, %v588
    %v590 = vmul.f32 %v549, %v574
    %v591 = vmul.f32 %v551, %v589
    %v592 = vmul.f32 %v590, %v354
    %v593 = vmul.f32 %v591, %v355
    %v594 = vmul.f32 %v555, %v574
    %v595 = vmul.f32 %v557, %v589
    %v596 = vmul.f32 %v594, %v502
    %v597 = vmul.f32 %v595, %v503
    %v598 = vadd.f32 %v592, %v596
    %v599 = vadd.f32 %v593, %v597
    %v600 = vmax.f32 %v598, 0.0
    %v601 = vmax.f32 %v599, 0.0
    %602 = vmatpush.msra.mxu0 0.0
    %603 = vmatpush.msra.mxu0 0.0
    %604 = vmatpush.msra.mxu0 0.0
    %605 = vmatpush.msra.mxu0 0.0
    %606 = vmatpush.msra.mxu0 0.0
    %607 = vmatpush.msra.mxu0 0.0
    %608 = vmatpush.msra.mxu0 0.0
    %609 = vmatpush.msra.mxu0 0.0
    %610 = vmatpush.msra.mxu0 0.0
    %611 = vmatpush.msra.mxu0 0.0
    %612 = vmatpush.msra.mxu0 0.0
    %613 = vmatpush.msra.mxu0 0.0
    %614 = vmatpush.msra.mxu0 0.0
    %615 = vmatpush.msra.mxu0 0.0
    %616 = vmatpush.msra.mxu0 %v355
    %617 = vmatpush.msra.mxu0 %v354
    %618 = vmatmul.f32.gmra.mxu0 %v434
    %v619 = vpop.f32.mrf.mxu0
    %v620 = vadd.f32 0.0, %v619
    %621 = vdwg.mxu0
    %623 = vset.pattern.permute.xlu0 0
    %624 = vperm.xlu0 %623, %v472
    %v625 = vpop.permute.xlu0 %624
    %v627 = vmul.f32 %v620, %v625
    %v628 = vmul.f32 %v357, %v298
    %v629 = vsel %vm173, %v628, 0.0
    %630 = vadd.xlane.f32.xlu0 %v629
    %v631 = vpop.xlane.xlu0 %630
    %v632 = vmul.f32 %v627, %v303
    %v633 = vmul.f32 %v357, %v305
    %v634 = vadd.f32 %v632, %v633
    %v635 = vsel %vm173, %v634, 0.0
    %636 = vadd.xlane.f32.xlu0 %v635
    %v637 = vpop.xlane.xlu0 %636
    %vm638 = vcmp.gt.f32.partialorder %v631, 0.0
    %v639 = vmul.f32 %v631, 1.442695
    %v640 = vpow.pop %v639
    %v641 = vsub.f32 %v640, 1.0
    %v642 = vsel %vm638, %v631, %v641
    %vm643 = vcmp.gt.f32.partialorder %v637, 0.0
    %v644 = vmul.f32 %v637, 1.442695
    %v645 = vpow.pop %v644
    %v646 = vsub.f32 %v645, 1.0
    %v647 = vsel %vm643, %v637, %v646
    %v648 = vmax.f32 %v642, %v647
    %v649 = vsub.f32 %v642, %v648
    %v650 = vmul.f32 %v649, 1.442695
    %v651 = vpow.pop %v650
    %v652 = vsub.f32 %v647, %v648
    %v653 = vmul.f32 %v652, 1.442695
    %v654 = vpow.pop %v653
    %v655 = vadd.f32 %v651, %v654
    %v656 = vrcp.pop %v655
    %v657 = vmul.f32 %v655, %v656
    %v658 = vsub.f32 1.0, %v657
    %v659 = vmul.f32 %v656, %v658
    %v660 = vadd.f32 %v656, %v659
    %vm661 = vweird.f32 %v655
    %vm662 = vweird.f32 %v656
    %vm663 = vmor %vm661, %vm662
    %v664 = vsel %vm663, %v656, %v660
    %v665 = vand.u32 2147483647, %v655
    %vm666 = vcmp.eq.f32.partialorder %v665, 8.507059e+37
    %v667 = vand.u32 %v655, 2147483648
    %v668 = vor.u32 1.1754944e-38, %v667
    %v669 = vsel %vm666, %v668, %v664
    %v670 = vmul.f32 1.0, %v669
    %v671 = vmul.f32 %v651, %v670
    %v672 = vmul.f32 %v671, %v357
    %v673 = vmul.f32 %v654, %v670
    %v674 = vmul.f32 %v673, %v627
    %v675 = vadd.f32 %v672, %v674
    %v676 = vmax.f32 %v675, 0.0
    %s677 = scalar_lea.vmem [#allocation2], 24
    %678 = vst.msk [vmem:[%s677] sm:$0xff] %vm173, %v600
    %679 = vst.msk [vmem:[%s677 + $0x8] sm:$0xff] %vm173, %v601
    %680 = vst.msk [vmem:[%s677 + $0x10] sm:$0xff] %vm173, %v676
    // Predicated region
    $region18: #{tpu_custom_call.1} parent=1 // pred_check
      _
    $region19: #{tpu_custom_call.1} parent=1 // pred_check_branch
      %682 = sbr.rel (0) target = $region21
    $region20: #{tpu_custom_call.1} parent=1 // pred_region
      %684 = vsyncadd [#allocation3], 0
      %s685 = sshll.u32 [#allocation2], 4
      %s686 = int_to_ptr.vmem [resolvable:$true] %s685
      %s687 = sshll.u32 %s4, 4
      %s688 = int_to_ptr.hbm [resolvable:$true] %s687
      %693 = dma.vmem_to_hbm [thread:$0]  %s686, 768, %s688, [#allocation3], 128, 128, 8
    $region21: #{tpu_custom_call.1} parent=1 // pred_fallthru
      _
    // Predicated region
    $region22: #{tpu_custom_call.1} parent=1 // pred_check
      _
    $region23: #{tpu_custom_call.1} parent=1 // pred_check_branch
      %695 = sbr.rel (0) target = $region25
    $region24: #{tpu_custom_call.1} parent=1 // pred_region
      %697 = dma.done [#allocation3], 768
    $region25: #{tpu_custom_call.1} parent=1 // pred_fallthru
      _
    %698 = vsyncpa [#allocation3], 1

</llo_original>
